<compile_context>
chip_gen: v7x
topology: tpu7x:2x2x1
jax: 0.10.0
libtpu: 0.0.40
codegen_flags: <defaults>
</compile_context>

<pallas_src>
import functools

import jax
import jax.numpy as jnp
from jax.experimental import pallas as pl
from jax.experimental.pallas import tpu as pltpu


# ----------------------------------------------------------------------------
# In-kernel helper: Conv1d (stride 1) + BatchNorm1d (train stats) + ReLU
#                   + optional (residual add + ReLU).  Operates on VALUES.
# ----------------------------------------------------------------------------
def _conv_bn_relu(xin, w_koc, bias, gamma, beta, *, dilation, pad_l, pad_r,
                  residual=None):
    # xin: (bs, C, L) f32    w_koc: (K, O, C)    bias/gamma/beta: (O, 1)
    bs, C, L = xin.shape
    K, O, _ = w_koc.shape

    # Padding folded into the kernel: concatenate zeros along the time (lane) dim.
    pieces = []
    if pad_l:
        pieces.append(jnp.zeros((bs, C, pad_l), jnp.float32))
    pieces.append(xin)
    if pad_r:
        pieces.append(jnp.zeros((bs, C, pad_r), jnp.float32))
    xp = jnp.concatenate(pieces, axis=-1) if len(pieces) > 1 else xin

    # One batched matmul per tap: (bs, O, C) x (bs, C, L) -> (bs, O, L).
    acc = None
    for j in range(K):
        off = j * dilation
        xs = xp[:, :, off:off + L]                              # shifted slice
        w_b = jnp.broadcast_to(w_koc[j][None], (bs, O, C))
        yj = jax.lax.dot_general(w_b, xs, (((2,), (1,)), ((0,), (0,))),
                                 preferred_element_type=jnp.float32)
        acc = yj if acc is None else acc + yj
    y = acc
    if bias is not None:
        y = y + bias[None]                                      # (1, O, 1)

    # BatchNorm1d, training mode: biased statistics over (batch, time).
    # Nested equal-size means == mean over axes (0, 2).
    m = jnp.mean(jnp.mean(y, axis=2, keepdims=True), axis=0, keepdims=True)
    v = jnp.mean(jnp.mean((y - m) ** 2, axis=2, keepdims=True),
                 axis=0, keepdims=True)
    yn = (y - m) * jax.lax.rsqrt(v + 1e-5)
    yn = yn * gamma[None] + beta[None]
    yn = jnp.maximum(yn, 0.0)                                   # ReLU
    if residual is not None:
        yn = jnp.maximum(yn + residual, 0.0)                    # relu(x + res)
    return yn


# ----------------------------------------------------------------------------
# Fused forward kernel
# ----------------------------------------------------------------------------
def _st_conv_kernel(x_ref, gcn_w_ref, gcn_b_ref,
                    cnn_w_ref, cnn_b_ref, cnn_g_ref, cnn_be_ref,
                    tcn_w1_ref, tcn_g1_ref, tcn_be1_ref,
                    tcn_w2_ref, tcn_g2_ref, tcn_be2_ref,
                    theta_ref, fcw_ref, fcb_ref, o_ref, *, kernel_size):
    K = kernel_size
    x = x_ref[...]                                              # (bs, N, f)

    # ---- PCC adjacency + MPNN_mk(k=1) + leaky_relu --------------------------
    mean = jnp.mean(x, axis=-1, keepdims=True)
    c = x - mean
    sq = jnp.sum(c * c, axis=-1, keepdims=True)                 # (bs, N, 1)
    c_hat = c * jax.lax.rsqrt(sq + 1e-12)                       # row-normalize (EUP)
    adj = jnp.einsum('bnf,bmf->bnm', c_hat, c_hat,
                     preferred_element_type=jnp.float32)        # PCC (bs, N, N)
    h = jnp.einsum('bnm,bmf->bnf', adj, x,
                   preferred_element_type=jnp.float32)
    z = jnp.einsum('bnf,gf->bng', h, gcn_w_ref[...],
                   preferred_element_type=jnp.float32) + gcn_b_ref[...][None]
    gcn = jnp.where(z >= 0.0, z, 0.01 * z)                      # leaky_relu(0.01)

    # ---- CNNLayer on the GCN branch ('same' padding) -------------------------
    same = K - 1
    gcn = _conv_bn_relu(gcn, cnn_w_ref[...], cnn_b_ref[...],
                        cnn_g_ref[...], cnn_be_ref[...],
                        dilation=1, pad_l=same // 2, pad_r=same - same // 2)

    # ---- TemporalConvNet branch (causal: left pad == chomp, bias=False) ------
    out0 = _conv_bn_relu(x, tcn_w1_ref[...], None,
                         tcn_g1_ref[...], tcn_be1_ref[...],
                         dilation=1, pad_l=(K - 1), pad_r=0, residual=x)
    tcn = _conv_bn_relu(out0, tcn_w2_ref[...], None,
                        tcn_g2_ref[...], tcn_be2_ref[...],
                        dilation=2, pad_l=2 * (K - 1), pad_r=0, residual=out0)

    # ---- gated combine + residual + flatten + fc(N*f -> 1) -------------------
    # Branch 2 of the torch forward reuses the same submodules on the same
    # input, so its outputs equal gcn / tcn.
    t1 = theta_ref[0]
    t2 = theta_ref[1]
    t3 = theta_ref[2]
    t4 = theta_ref[3]
    gate_a = jnp.tanh(t1 * tcn + t2 * gcn)
    gate_b = jax.nn.sigmoid(t3 * tcn + t4 * gcn)
    residual = gate_a * gate_b + x                              # (bs, N, f)
    prod = residual * fcw_ref[...][None]                        # fc weight (N, f)
    s = jnp.sum(jnp.sum(prod, axis=2, keepdims=True), axis=1)   # (bs, 1)
    o_ref[...] = s + fcb_ref[0]                                 # single write


# ----------------------------------------------------------------------------
# Wrapper: one pallas_call for the whole forward
# ----------------------------------------------------------------------------
def st_conv_forward(x, p, kernel_size=3):
    bs, N, f = x.shape
    vmem = pl.BlockSpec(memory_space=pltpu.MemorySpace.VMEM)
    smem = pl.BlockSpec(memory_space=pltpu.MemorySpace.SMEM)
    kernel = functools.partial(_st_conv_kernel, kernel_size=kernel_size)
    args = (x,
            p["gcn_w"], p["gcn_b"],
            p["cnn_w"], p["cnn_b"], p["cnn_gamma"], p["cnn_beta"],
            p["tcn_w1"], p["tcn_g1"], p["tcn_beta1"],
            p["tcn_w2"], p["tcn_g2"], p["tcn_beta2"],
            p["theta"], p["fc_w"], p["fc_b"])
    in_specs = [vmem] * 13 + [smem, vmem, smem]
    return pl.pallas_call(
        kernel,
        out_shape=jax.ShapeDtypeStruct((bs, 1), jnp.float32),
        in_specs=in_specs,
        out_specs=vmem,
    )(*args)


# ----------------------------------------------------------------------------
# Parameter init (shapes pre-arranged for the kernel: conv weights (K, O, C),
# biases/BN params (O, 1), fc weight (1, N*f) reshaped to (N, f)).
# ----------------------------------------------------------------------------
def init_params(key, N, f, K):
    ks = jax.random.split(key, 9)
    s = 0.1
    return {
        "gcn_w": jax.random.normal(ks[0], (f, f), jnp.float32) * s,
        "gcn_b": jax.random.normal(ks[1], (1, f), jnp.float32) * s,
        "cnn_w": jax.random.normal(ks[2], (K, N, N), jnp.float32) * s,   # (K,O,C)
        "cnn_b": jax.random.normal(ks[3], (N, 1), jnp.float32) * s,
        "cnn_gamma": jnp.ones((N, 1), jnp.float32),
        "cnn_beta": jnp.zeros((N, 1), jnp.float32),
        "tcn_w1": jax.random.normal(ks[4], (K, N, N), jnp.float32) * s,
        "tcn_g1": jnp.ones((N, 1), jnp.float32),
        "tcn_beta1": jnp.zeros((N, 1), jnp.float32),
        "tcn_w2": jax.random.normal(ks[5], (K, N, N), jnp.float32) * s,
        "tcn_g2": jnp.ones((N, 1), jnp.float32),
        "tcn_beta2": jnp.zeros((N, 1), jnp.float32),
        "theta": jax.random.normal(ks[6], (4,), jnp.float32),
        "fc_w": jax.random.normal(ks[7], (N, f), jnp.float32) * s,       # (1,N*f)->(N,f)
        "fc_b": jax.random.normal(ks[8], (1,), jnp.float32) * s,
    }


if __name__ == "__main__":
    bs, num_nodes, time_length, kernel_size = 2, 4, 16, 3
    key = jax.random.PRNGKey(0)
    kx, kp = jax.random.split(key)
    x = jax.random.normal(kx, (bs, num_nodes, time_length), jnp.float32)
    params = init_params(kp, num_nodes, time_length, kernel_size)

    out = st_conv_forward(x, params, kernel_size)
    out = jax.block_until_ready(out)
    assert out.shape == (bs, 1), out.shape
    assert bool(jnp.all(jnp.isfinite(out)))
    print("KERNEL_OK")
</pallas_src>

<mosaic_0001>
module attributes {stable_mosaic.version = 11 : i64} {
  func.func @_st_conv_kernel(%arg0: memref<2x4x16xf32, #tpu.memory_space<vmem>>, %arg1: memref<16x16xf32, #tpu.memory_space<vmem>>, %arg2: memref<1x16xf32, #tpu.memory_space<vmem>>, %arg3: memref<3x4x4xf32, #tpu.memory_space<vmem>>, %arg4: memref<4x1xf32, #tpu.memory_space<vmem>>, %arg5: memref<4x1xf32, #tpu.memory_space<vmem>>, %arg6: memref<4x1xf32, #tpu.memory_space<vmem>>, %arg7: memref<3x4x4xf32, #tpu.memory_space<vmem>>, %arg8: memref<4x1xf32, #tpu.memory_space<vmem>>, %arg9: memref<4x1xf32, #tpu.memory_space<vmem>>, %arg10: memref<3x4x4xf32, #tpu.memory_space<vmem>>, %arg11: memref<4x1xf32, #tpu.memory_space<vmem>>, %arg12: memref<4x1xf32, #tpu.memory_space<vmem>>, %arg13: memref<4xf32, #tpu.memory_space<smem>>, %arg14: memref<4x16xf32, #tpu.memory_space<vmem>>, %arg15: memref<1xf32, #tpu.memory_space<smem>>, %arg16: memref<2x1xf32, #tpu.memory_space<vmem>>) attributes {dimension_semantics = [], scalar_prefetch = 0 : i64, scratch_operands = 0 : i64, tpu.core_type = #tpu.core_type<tc>} {
    %c0 = arith.constant 0 : index
    %c0_0 = arith.constant 0 : index
    %c0_1 = arith.constant 0 : index
    %0 = vector.load %arg0[%c0, %c0_0, %c0_1] : memref<2x4x16xf32, #tpu.memory_space<vmem>>, vector<2x4x16xf32>
    %cst = arith.constant dense<0.000000e+00> : vector<2x4xf32>
    %1 = vector.multi_reduction <add>, %0, %cst [2] : vector<2x4x16xf32> to vector<2x4xf32>
    %2 = vector.shape_cast %1 : vector<2x4xf32> to vector<2x4x1xf32>
    %cst_2 = arith.constant 1.600000e+01 : f32
    %3 = vector.broadcast %cst_2 : f32 to vector<2x4x1xf32>
    %4 = arith.divf %2, %3 : vector<2x4x1xf32>
    %5 = vector.broadcast %4 : vector<2x4x1xf32> to vector<2x4x16xf32>
    %6 = arith.subf %0, %5 : vector<2x4x16xf32>
    %7 = arith.mulf %6, %6 : vector<2x4x16xf32>
    %cst_3 = arith.constant dense<0.000000e+00> : vector<2x4xf32>
    %8 = vector.multi_reduction <add>, %7, %cst_3 [2] : vector<2x4x16xf32> to vector<2x4xf32>
    %9 = vector.shape_cast %8 : vector<2x4xf32> to vector<2x4x1xf32>
    %cst_4 = arith.constant 9.99999996E-13 : f32
    %10 = vector.broadcast %cst_4 : f32 to vector<2x4x1xf32>
    %11 = arith.addf %9, %10 : vector<2x4x1xf32>
    %12 = math.rsqrt %11 : vector<2x4x1xf32>
    %13 = vector.broadcast %12 : vector<2x4x1xf32> to vector<2x4x16xf32>
    %14 = arith.mulf %6, %13 : vector<2x4x16xf32>
    "tpu.trace_start"() <{level = 10 : i32, message = "bnf,bmf->bnm"}> : () -> ()
    %cst_5 = arith.constant dense<0.000000e+00> : vector<2x4x4xf32>
    %15 = tpu.matmul %14, %14, %cst_5 {dimension_numbers = #tpu.dot_dimension_numbers<[2], [2], [1], [1], [0, 0, 0, 1, 1, 1], [0], [0]>} : vector<2x4x16xf32>, vector<2x4x16xf32>, vector<2x4x4xf32> -> vector<2x4x4xf32>
    "tpu.trace_stop"() : () -> ()
    "tpu.trace_start"() <{level = 10 : i32, message = "bnm,bmf->bnf"}> : () -> ()
    %cst_6 = arith.constant dense<0.000000e+00> : vector<2x4x16xf32>
    %16 = tpu.matmul %15, %0, %cst_6 {dimension_numbers = #tpu.dot_dimension_numbers<[2], [1], [1], [2], [0, 0, 0, 1, 1, 2], [0], [0]>} : vector<2x4x4xf32>, vector<2x4x16xf32>, vector<2x4x16xf32> -> vector<2x4x16xf32>
    "tpu.trace_stop"() : () -> ()
    %c0_7 = arith.constant 0 : index
    %c0_8 = arith.constant 0 : index
    %17 = vector.load %arg1[%c0_7, %c0_8] : memref<16x16xf32, #tpu.memory_space<vmem>>, vector<16x16xf32>
    "tpu.trace_start"() <{level = 10 : i32, message = "bnf,gf->bng"}> : () -> ()
    %cst_9 = arith.constant dense<0.000000e+00> : vector<2x4x16xf32>
    %18 = tpu.matmul %16, %17, %cst_9 {dimension_numbers = #tpu.dot_dimension_numbers<[2], [1], [0, 1], [0], [0, 0, 0, 1, 1, 0], [], []>} : vector<2x4x16xf32>, vector<16x16xf32>, vector<2x4x16xf32> -> vector<2x4x16xf32>
    "tpu.trace_stop"() : () -> ()
    %c0_10 = arith.constant 0 : index
    %c0_11 = arith.constant 0 : index
    %19 = vector.load %arg2[%c0_10, %c0_11] : memref<1x16xf32, #tpu.memory_space<vmem>>, vector<1x16xf32>
    %20 = vector.shape_cast %19 : vector<1x16xf32> to vector<1x1x16xf32>
    %21 = vector.broadcast %20 : vector<1x1x16xf32> to vector<2x4x16xf32>
    %22 = arith.addf %18, %21 : vector<2x4x16xf32>
    %cst_12 = arith.constant 0.000000e+00 : f32
    %23 = vector.broadcast %cst_12 : f32 to vector<2x4x16xf32>
    %24 = arith.cmpf oge, %22, %23 : vector<2x4x16xf32>
    %cst_13 = arith.constant 0.00999999977 : f32
    %25 = vector.broadcast %cst_13 : f32 to vector<2x4x16xf32>
    %26 = arith.mulf %25, %22 : vector<2x4x16xf32>
    %27 = arith.select %24, %22, %26 : vector<2x4x16xi1>, vector<2x4x16xf32>
    %c0_14 = arith.constant 0 : index
    %c0_15 = arith.constant 0 : index
    %c0_16 = arith.constant 0 : index
    %28 = vector.load %arg3[%c0_14, %c0_15, %c0_16] : memref<3x4x4xf32, #tpu.memory_space<vmem>>, vector<3x4x4xf32>
    %c0_17 = arith.constant 0 : index
    %c0_18 = arith.constant 0 : index
    %29 = vector.load %arg4[%c0_17, %c0_18] : memref<4x1xf32, #tpu.memory_space<vmem>>, vector<4x1xf32>
    %c0_19 = arith.constant 0 : index
    %c0_20 = arith.constant 0 : index
    %30 = vector.load %arg5[%c0_19, %c0_20] : memref<4x1xf32, #tpu.memory_space<vmem>>, vector<4x1xf32>
    %c0_21 = arith.constant 0 : index
    %c0_22 = arith.constant 0 : index
    %31 = vector.load %arg6[%c0_21, %c0_22] : memref<4x1xf32, #tpu.memory_space<vmem>>, vector<4x1xf32>
    %cst_23 = arith.constant 0.000000e+00 : f32
    %32 = vector.broadcast %cst_23 : f32 to vector<2x4x1xf32>
    %cst_24 = arith.constant 0.000000e+00 : f32
    %33 = vector.broadcast %cst_24 : f32 to vector<2x4x1xf32>
    %34 = tpu.concatenate %32, %27, %33 in 2 : vector<2x4x1xf32>, vector<2x4x16xf32>, vector<2x4x1xf32> -> vector<2x4x18xf32>
    %35 = vector.extract_strided_slice %34 {offsets = [0, 0, 0], sizes = [2, 4, 16], strides = [1, 1, 1]} : vector<2x4x18xf32> to vector<2x4x16xf32>
    %36 = vector.extract_strided_slice %28 {offsets = [0, 0, 0], sizes = [1, 4, 4], strides = [1, 1, 1]} : vector<3x4x4xf32> to vector<1x4x4xf32>
    %37 = vector.shape_cast %36 : vector<1x4x4xf32> to vector<4x4xf32>
    %38 = vector.shape_cast %37 : vector<4x4xf32> to vector<1x4x4xf32>
    %39 = vector.shape_cast %38 : vector<1x4x4xf32> to vector<1x4x4xf32>
    %40 = vector.broadcast %39 : vector<1x4x4xf32> to vector<2x4x4xf32>
    %cst_25 = arith.constant dense<0.000000e+00> : vector<2x4x16xf32>
    %41 = tpu.matmul %40, %35, %cst_25 {dimension_numbers = #tpu.dot_dimension_numbers<[2], [1], [1], [2], [0, 0, 0, 1, 1, 2], [0], [0]>} : vector<2x4x4xf32>, vector<2x4x16xf32>, vector<2x4x16xf32> -> vector<2x4x16xf32>
    %42 = vector.extract_strided_slice %34 {offsets = [0, 0, 1], sizes = [2, 4, 16], strides = [1, 1, 1]} : vector<2x4x18xf32> to vector<2x4x16xf32>
    %43 = vector.extract_strided_slice %28 {offsets = [1, 0, 0], sizes = [1, 4, 4], strides = [1, 1, 1]} : vector<3x4x4xf32> to vector<1x4x4xf32>
    %44 = vector.shape_cast %43 : vector<1x4x4xf32> to vector<4x4xf32>
    %45 = vector.shape_cast %44 : vector<4x4xf32> to vector<1x4x4xf32>
    %46 = vector.shape_cast %45 : vector<1x4x4xf32> to vector<1x4x4xf32>
    %47 = vector.broadcast %46 : vector<1x4x4xf32> to vector<2x4x4xf32>
    %cst_26 = arith.constant dense<0.000000e+00> : vector<2x4x16xf32>
    %48 = tpu.matmul %47, %42, %cst_26 {dimension_numbers = #tpu.dot_dimension_numbers<[2], [1], [1], [2], [0, 0, 0, 1, 1, 2], [0], [0]>} : vector<2x4x4xf32>, vector<2x4x16xf32>, vector<2x4x16xf32> -> vector<2x4x16xf32>
    %49 = arith.addf %41, %48 : vector<2x4x16xf32>
    %50 = vector.extract_strided_slice %34 {offsets = [0, 0, 2], sizes = [2, 4, 16], strides = [1, 1, 1]} : vector<2x4x18xf32> to vector<2x4x16xf32>
    %51 = vector.extract_strided_slice %28 {offsets = [2, 0, 0], sizes = [1, 4, 4], strides = [1, 1, 1]} : vector<3x4x4xf32> to vector<1x4x4xf32>
    %52 = vector.shape_cast %51 : vector<1x4x4xf32> to vector<4x4xf32>
    %53 = vector.shape_cast %52 : vector<4x4xf32> to vector<1x4x4xf32>
    %54 = vector.shape_cast %53 : vector<1x4x4xf32> to vector<1x4x4xf32>
    %55 = vector.broadcast %54 : vector<1x4x4xf32> to vector<2x4x4xf32>
    %cst_27 = arith.constant dense<0.000000e+00> : vector<2x4x16xf32>
    %56 = tpu.matmul %55, %50, %cst_27 {dimension_numbers = #tpu.dot_dimension_numbers<[2], [1], [1], [2], [0, 0, 0, 1, 1, 2], [0], [0]>} : vector<2x4x4xf32>, vector<2x4x16xf32>, vector<2x4x16xf32> -> vector<2x4x16xf32>
    %57 = arith.addf %49, %56 : vector<2x4x16xf32>
    %58 = vector.shape_cast %29 : vector<4x1xf32> to vector<1x4x1xf32>
    %59 = vector.broadcast %58 : vector<1x4x1xf32> to vector<2x4x16xf32>
    %60 = arith.addf %57, %59 : vector<2x4x16xf32>
    %cst_28 = arith.constant dense<0.000000e+00> : vector<2x4xf32>
    %61 = vector.multi_reduction <add>, %60, %cst_28 [2] : vector<2x4x16xf32> to vector<2x4xf32>
    %62 = vector.shape_cast %61 : vector<2x4xf32> to vector<2x4x1xf32>
    %cst_29 = arith.constant 1.600000e+01 : f32
    %63 = vector.broadcast %cst_29 : f32 to vector<2x4x1xf32>
    %64 = arith.divf %62, %63 : vector<2x4x1xf32>
    %cst_30 = arith.constant dense<0.000000e+00> : vector<4x1xf32>
    %65 = vector.multi_reduction <add>, %64, %cst_30 [0] : vector<2x4x1xf32> to vector<4x1xf32>
    %66 = vector.shape_cast %65 : vector<4x1xf32> to vector<1x4x1xf32>
    %cst_31 = arith.constant 2.000000e+00 : f32
    %67 = vector.broadcast %cst_31 : f32 to vector<1x4x1xf32>
    %68 = arith.divf %66, %67 : vector<1x4x1xf32>
    %69 = vector.broadcast %68 : vector<1x4x1xf32> to vector<2x4x16xf32>
    %70 = arith.subf %60, %69 : vector<2x4x16xf32>
    %71 = arith.mulf %70, %70 : vector<2x4x16xf32>
    %cst_32 = arith.constant dense<0.000000e+00> : vector<2x4xf32>
    %72 = vector.multi_reduction <add>, %71, %cst_32 [2] : vector<2x4x16xf32> to vector<2x4xf32>
    %73 = vector.shape_cast %72 : vector<2x4xf32> to vector<2x4x1xf32>
    %cst_33 = arith.constant 1.600000e+01 : f32
    %74 = vector.broadcast %cst_33 : f32 to vector<2x4x1xf32>
    %75 = arith.divf %73, %74 : vector<2x4x1xf32>
    %cst_34 = arith.constant dense<0.000000e+00> : vector<4x1xf32>
    %76 = vector.multi_reduction <add>, %75, %cst_34 [0] : vector<2x4x1xf32> to vector<4x1xf32>
    %77 = vector.shape_cast %76 : vector<4x1xf32> to vector<1x4x1xf32>
    %cst_35 = arith.constant 2.000000e+00 : f32
    %78 = vector.broadcast %cst_35 : f32 to vector<1x4x1xf32>
    %79 = arith.divf %77, %78 : vector<1x4x1xf32>
    %80 = vector.broadcast %68 : vector<1x4x1xf32> to vector<2x4x16xf32>
    %81 = arith.subf %60, %80 : vector<2x4x16xf32>
    %cst_36 = arith.constant 9.99999974E-6 : f32
    %82 = vector.broadcast %cst_36 : f32 to vector<1x4x1xf32>
    %83 = arith.addf %79, %82 : vector<1x4x1xf32>
    %84 = math.rsqrt %83 : vector<1x4x1xf32>
    %85 = vector.broadcast %84 : vector<1x4x1xf32> to vector<2x4x16xf32>
    %86 = arith.mulf %81, %85 : vector<2x4x16xf32>
    %87 = vector.shape_cast %30 : vector<4x1xf32> to vector<1x4x1xf32>
    %88 = vector.broadcast %87 : vector<1x4x1xf32> to vector<2x4x16xf32>
    %89 = arith.mulf %86, %88 : vector<2x4x16xf32>
    %90 = vector.shape_cast %31 : vector<4x1xf32> to vector<1x4x1xf32>
    %91 = vector.broadcast %90 : vector<1x4x1xf32> to vector<2x4x16xf32>
    %92 = arith.addf %89, %91 : vector<2x4x16xf32>
    %cst_37 = arith.constant 0.000000e+00 : f32
    %93 = vector.broadcast %cst_37 : f32 to vector<2x4x16xf32>
    %94 = arith.maximumf %92, %93 : vector<2x4x16xf32>
    %c0_38 = arith.constant 0 : index
    %c0_39 = arith.constant 0 : index
    %c0_40 = arith.constant 0 : index
    %95 = vector.load %arg7[%c0_38, %c0_39, %c0_40] : memref<3x4x4xf32, #tpu.memory_space<vmem>>, vector<3x4x4xf32>
    %c0_41 = arith.constant 0 : index
    %c0_42 = arith.constant 0 : index
    %96 = vector.load %arg8[%c0_41, %c0_42] : memref<4x1xf32, #tpu.memory_space<vmem>>, vector<4x1xf32>
    %c0_43 = arith.constant 0 : index
    %c0_44 = arith.constant 0 : index
    %97 = vector.load %arg9[%c0_43, %c0_44] : memref<4x1xf32, #tpu.memory_space<vmem>>, vector<4x1xf32>
    %cst_45 = arith.constant 0.000000e+00 : f32
    %98 = vector.broadcast %cst_45 : f32 to vector<2x4x2xf32>
    %99 = tpu.concatenate %98, %0 in 2 : vector<2x4x2xf32>, vector<2x4x16xf32> -> vector<2x4x18xf32>
    %100 = vector.extract_strided_slice %99 {offsets = [0, 0, 0], sizes = [2, 4, 16], strides = [1, 1, 1]} : vector<2x4x18xf32> to vector<2x4x16xf32>
    %101 = vector.extract_strided_slice %95 {offsets = [0, 0, 0], sizes = [1, 4, 4], strides = [1, 1, 1]} : vector<3x4x4xf32> to vector<1x4x4xf32>
    %102 = vector.shape_cast %101 : vector<1x4x4xf32> to vector<4x4xf32>
    %103 = vector.shape_cast %102 : vector<4x4xf32> to vector<1x4x4xf32>
    %104 = vector.shape_cast %103 : vector<1x4x4xf32> to vector<1x4x4xf32>
    %105 = vector.broadcast %104 : vector<1x4x4xf32> to vector<2x4x4xf32>
    %cst_46 = arith.constant dense<0.000000e+00> : vector<2x4x16xf32>
    %106 = tpu.matmul %105, %100, %cst_46 {dimension_numbers = #tpu.dot_dimension_numbers<[2], [1], [1], [2], [0, 0, 0, 1, 1, 2], [0], [0]>} : vector<2x4x4xf32>, vector<2x4x16xf32>, vector<2x4x16xf32> -> vector<2x4x16xf32>
    %107 = vector.extract_strided_slice %99 {offsets = [0, 0, 1], sizes = [2, 4, 16], strides = [1, 1, 1]} : vector<2x4x18xf32> to vector<2x4x16xf32>
    %108 = vector.extract_strided_slice %95 {offsets = [1, 0, 0], sizes = [1, 4, 4], strides = [1, 1, 1]} : vector<3x4x4xf32> to vector<1x4x4xf32>
    %109 = vector.shape_cast %108 : vector<1x4x4xf32> to vector<4x4xf32>
    %110 = vector.shape_cast %109 : vector<4x4xf32> to vector<1x4x4xf32>
    %111 = vector.shape_cast %110 : vector<1x4x4xf32> to vector<1x4x4xf32>
    %112 = vector.broadcast %111 : vector<1x4x4xf32> to vector<2x4x4xf32>
    %cst_47 = arith.constant dense<0.000000e+00> : vector<2x4x16xf32>
    %113 = tpu.matmul %112, %107, %cst_47 {dimension_numbers = #tpu.dot_dimension_numbers<[2], [1], [1], [2], [0, 0, 0, 1, 1, 2], [0], [0]>} : vector<2x4x4xf32>, vector<2x4x16xf32>, vector<2x4x16xf32> -> vector<2x4x16xf32>
    %114 = arith.addf %106, %113 : vector<2x4x16xf32>
    %115 = vector.extract_strided_slice %99 {offsets = [0, 0, 2], sizes = [2, 4, 16], strides = [1, 1, 1]} : vector<2x4x18xf32> to vector<2x4x16xf32>
    %116 = vector.extract_strided_slice %95 {offsets = [2, 0, 0], sizes = [1, 4, 4], strides = [1, 1, 1]} : vector<3x4x4xf32> to vector<1x4x4xf32>
    %117 = vector.shape_cast %116 : vector<1x4x4xf32> to vector<4x4xf32>
    %118 = vector.shape_cast %117 : vector<4x4xf32> to vector<1x4x4xf32>
    %119 = vector.shape_cast %118 : vector<1x4x4xf32> to vector<1x4x4xf32>
    %120 = vector.broadcast %119 : vector<1x4x4xf32> to vector<2x4x4xf32>
    %cst_48 = arith.constant dense<0.000000e+00> : vector<2x4x16xf32>
    %121 = tpu.matmul %120, %115, %cst_48 {dimension_numbers = #tpu.dot_dimension_numbers<[2], [1], [1], [2], [0, 0, 0, 1, 1, 2], [0], [0]>} : vector<2x4x4xf32>, vector<2x4x16xf32>, vector<2x4x16xf32> -> vector<2x4x16xf32>
    %122 = arith.addf %114, %121 : vector<2x4x16xf32>
    %cst_49 = arith.constant dense<0.000000e+00> : vector<2x4xf32>
    %123 = vector.multi_reduction <add>, %122, %cst_49 [2] : vector<2x4x16xf32> to vector<2x4xf32>
    %124 = vector.shape_cast %123 : vector<2x4xf32> to vector<2x4x1xf32>
    %cst_50 = arith.constant 1.600000e+01 : f32
    %125 = vector.broadcast %cst_50 : f32 to vector<2x4x1xf32>
    %126 = arith.divf %124, %125 : vector<2x4x1xf32>
    %cst_51 = arith.constant dense<0.000000e+00> : vector<4x1xf32>
    %127 = vector.multi_reduction <add>, %126, %cst_51 [0] : vector<2x4x1xf32> to vector<4x1xf32>
    %128 = vector.shape_cast %127 : vector<4x1xf32> to vector<1x4x1xf32>
    %cst_52 = arith.constant 2.000000e+00 : f32
    %129 = vector.broadcast %cst_52 : f32 to vector<1x4x1xf32>
    %130 = arith.divf %128, %129 : vector<1x4x1xf32>
    %131 = vector.broadcast %130 : vector<1x4x1xf32> to vector<2x4x16xf32>
    %132 = arith.subf %122, %131 : vector<2x4x16xf32>
    %133 = arith.mulf %132, %132 : vector<2x4x16xf32>
    %cst_53 = arith.constant dense<0.000000e+00> : vector<2x4xf32>
    %134 = vector.multi_reduction <add>, %133, %cst_53 [2] : vector<2x4x16xf32> to vector<2x4xf32>
    %135 = vector.shape_cast %134 : vector<2x4xf32> to vector<2x4x1xf32>
    %cst_54 = arith.constant 1.600000e+01 : f32
    %136 = vector.broadcast %cst_54 : f32 to vector<2x4x1xf32>
    %137 = arith.divf %135, %136 : vector<2x4x1xf32>
    %cst_55 = arith.constant dense<0.000000e+00> : vector<4x1xf32>
    %138 = vector.multi_reduction <add>, %137, %cst_55 [0] : vector<2x4x1xf32> to vector<4x1xf32>
    %139 = vector.shape_cast %138 : vector<4x1xf32> to vector<1x4x1xf32>
    %cst_56 = arith.constant 2.000000e+00 : f32
    %140 = vector.broadcast %cst_56 : f32 to vector<1x4x1xf32>
    %141 = arith.divf %139, %140 : vector<1x4x1xf32>
    %142 = vector.broadcast %130 : vector<1x4x1xf32> to vector<2x4x16xf32>
    %143 = arith.subf %122, %142 : vector<2x4x16xf32>
    %cst_57 = arith.constant 9.99999974E-6 : f32
    %144 = vector.broadcast %cst_57 : f32 to vector<1x4x1xf32>
    %145 = arith.addf %141, %144 : vector<1x4x1xf32>
    %146 = math.rsqrt %145 : vector<1x4x1xf32>
    %147 = vector.broadcast %146 : vector<1x4x1xf32> to vector<2x4x16xf32>
    %148 = arith.mulf %143, %147 : vector<2x4x16xf32>
    %149 = vector.shape_cast %96 : vector<4x1xf32> to vector<1x4x1xf32>
    %150 = vector.broadcast %149 : vector<1x4x1xf32> to vector<2x4x16xf32>
    %151 = arith.mulf %148, %150 : vector<2x4x16xf32>
    %152 = vector.shape_cast %97 : vector<4x1xf32> to vector<1x4x1xf32>
    %153 = vector.broadcast %152 : vector<1x4x1xf32> to vector<2x4x16xf32>
    %154 = arith.addf %151, %153 : vector<2x4x16xf32>
    %cst_58 = arith.constant 0.000000e+00 : f32
    %155 = vector.broadcast %cst_58 : f32 to vector<2x4x16xf32>
    %156 = arith.maximumf %154, %155 : vector<2x4x16xf32>
    %157 = arith.addf %156, %0 : vector<2x4x16xf32>
    %cst_59 = arith.constant 0.000000e+00 : f32
    %158 = vector.broadcast %cst_59 : f32 to vector<2x4x16xf32>
    %159 = arith.maximumf %157, %158 : vector<2x4x16xf32>
    %c0_60 = arith.constant 0 : index
    %c0_61 = arith.constant 0 : index
    %c0_62 = arith.constant 0 : index
    %160 = vector.load %arg10[%c0_60, %c0_61, %c0_62] : memref<3x4x4xf32, #tpu.memory_space<vmem>>, vector<3x4x4xf32>
    %c0_63 = arith.constant 0 : index
    %c0_64 = arith.constant 0 : index
    %161 = vector.load %arg11[%c0_63, %c0_64] : memref<4x1xf32, #tpu.memory_space<vmem>>, vector<4x1xf32>
    %c0_65 = arith.constant 0 : index
    %c0_66 = arith.constant 0 : index
    %162 = vector.load %arg12[%c0_65, %c0_66] : memref<4x1xf32, #tpu.memory_space<vmem>>, vector<4x1xf32>
    %cst_67 = arith.constant 0.000000e+00 : f32
    %163 = vector.broadcast %cst_67 : f32 to vector<2x4x4xf32>
    %164 = tpu.concatenate %163, %159 in 2 : vector<2x4x4xf32>, vector<2x4x16xf32> -> vector<2x4x20xf32>
    %165 = vector.extract_strided_slice %164 {offsets = [0, 0, 0], sizes = [2, 4, 16], strides = [1, 1, 1]} : vector<2x4x20xf32> to vector<2x4x16xf32>
    %166 = vector.extract_strided_slice %160 {offsets = [0, 0, 0], sizes = [1, 4, 4], strides = [1, 1, 1]} : vector<3x4x4xf32> to vector<1x4x4xf32>
    %167 = vector.shape_cast %166 : vector<1x4x4xf32> to vector<4x4xf32>
    %168 = vector.shape_cast %167 : vector<4x4xf32> to vector<1x4x4xf32>
    %169 = vector.shape_cast %168 : vector<1x4x4xf32> to vector<1x4x4xf32>
    %170 = vector.broadcast %169 : vector<1x4x4xf32> to vector<2x4x4xf32>
    %cst_68 = arith.constant dense<0.000000e+00> : vector<2x4x16xf32>
    %171 = tpu.matmul %170, %165, %cst_68 {dimension_numbers = #tpu.dot_dimension_numbers<[2], [1], [1], [2], [0, 0, 0, 1, 1, 2], [0], [0]>} : vector<2x4x4xf32>, vector<2x4x16xf32>, vector<2x4x16xf32> -> vector<2x4x16xf32>
    %172 = vector.extract_strided_slice %164 {offsets = [0, 0, 2], sizes = [2, 4, 16], strides = [1, 1, 1]} : vector<2x4x20xf32> to vector<2x4x16xf32>
    %173 = vector.extract_strided_slice %160 {offsets = [1, 0, 0], sizes = [1, 4, 4], strides = [1, 1, 1]} : vector<3x4x4xf32> to vector<1x4x4xf32>
    %174 = vector.shape_cast %173 : vector<1x4x4xf32> to vector<4x4xf32>
    %175 = vector.shape_cast %174 : vector<4x4xf32> to vector<1x4x4xf32>
    %176 = vector.shape_cast %175 : vector<1x4x4xf32> to vector<1x4x4xf32>
    %177 = vector.broadcast %176 : vector<1x4x4xf32> to vector<2x4x4xf32>
    %cst_69 = arith.constant dense<0.000000e+00> : vector<2x4x16xf32>
    %178 = tpu.matmul %177, %172, %cst_69 {dimension_numbers = #tpu.dot_dimension_numbers<[2], [1], [1], [2], [0, 0, 0, 1, 1, 2], [0], [0]>} : vector<2x4x4xf32>, vector<2x4x16xf32>, vector<2x4x16xf32> -> vector<2x4x16xf32>
    %179 = arith.addf %171, %178 : vector<2x4x16xf32>
    %180 = vector.extract_strided_slice %164 {offsets = [0, 0, 4], sizes = [2, 4, 16], strides = [1, 1, 1]} : vector<2x4x20xf32> to vector<2x4x16xf32>
    %181 = vector.extract_strided_slice %160 {offsets = [2, 0, 0], sizes = [1, 4, 4], strides = [1, 1, 1]} : vector<3x4x4xf32> to vector<1x4x4xf32>
    %182 = vector.shape_cast %181 : vector<1x4x4xf32> to vector<4x4xf32>
    %183 = vector.shape_cast %182 : vector<4x4xf32> to vector<1x4x4xf32>
    %184 = vector.shape_cast %183 : vector<1x4x4xf32> to vector<1x4x4xf32>
    %185 = vector.broadcast %184 : vector<1x4x4xf32> to vector<2x4x4xf32>
    %cst_70 = arith.constant dense<0.000000e+00> : vector<2x4x16xf32>
    %186 = tpu.matmul %185, %180, %cst_70 {dimension_numbers = #tpu.dot_dimension_numbers<[2], [1], [1], [2], [0, 0, 0, 1, 1, 2], [0], [0]>} : vector<2x4x4xf32>, vector<2x4x16xf32>, vector<2x4x16xf32> -> vector<2x4x16xf32>
    %187 = arith.addf %179, %186 : vector<2x4x16xf32>
    %cst_71 = arith.constant dense<0.000000e+00> : vector<2x4xf32>
    %188 = vector.multi_reduction <add>, %187, %cst_71 [2] : vector<2x4x16xf32> to vector<2x4xf32>
    %189 = vector.shape_cast %188 : vector<2x4xf32> to vector<2x4x1xf32>
    %cst_72 = arith.constant 1.600000e+01 : f32
    %190 = vector.broadcast %cst_72 : f32 to vector<2x4x1xf32>
    %191 = arith.divf %189, %190 : vector<2x4x1xf32>
    %cst_73 = arith.constant dense<0.000000e+00> : vector<4x1xf32>
    %192 = vector.multi_reduction <add>, %191, %cst_73 [0] : vector<2x4x1xf32> to vector<4x1xf32>
    %193 = vector.shape_cast %192 : vector<4x1xf32> to vector<1x4x1xf32>
    %cst_74 = arith.constant 2.000000e+00 : f32
    %194 = vector.broadcast %cst_74 : f32 to vector<1x4x1xf32>
    %195 = arith.divf %193, %194 : vector<1x4x1xf32>
    %196 = vector.broadcast %195 : vector<1x4x1xf32> to vector<2x4x16xf32>
    %197 = arith.subf %187, %196 : vector<2x4x16xf32>
    %198 = arith.mulf %197, %197 : vector<2x4x16xf32>
    %cst_75 = arith.constant dense<0.000000e+00> : vector<2x4xf32>
    %199 = vector.multi_reduction <add>, %198, %cst_75 [2] : vector<2x4x16xf32> to vector<2x4xf32>
    %200 = vector.shape_cast %199 : vector<2x4xf32> to vector<2x4x1xf32>
    %cst_76 = arith.constant 1.600000e+01 : f32
    %201 = vector.broadcast %cst_76 : f32 to vector<2x4x1xf32>
    %202 = arith.divf %200, %201 : vector<2x4x1xf32>
    %cst_77 = arith.constant dense<0.000000e+00> : vector<4x1xf32>
    %203 = vector.multi_reduction <add>, %202, %cst_77 [0] : vector<2x4x1xf32> to vector<4x1xf32>
    %204 = vector.shape_cast %203 : vector<4x1xf32> to vector<1x4x1xf32>
    %cst_78 = arith.constant 2.000000e+00 : f32
    %205 = vector.broadcast %cst_78 : f32 to vector<1x4x1xf32>
    %206 = arith.divf %204, %205 : vector<1x4x1xf32>
    %207 = vector.broadcast %195 : vector<1x4x1xf32> to vector<2x4x16xf32>
    %208 = arith.subf %187, %207 : vector<2x4x16xf32>
    %cst_79 = arith.constant 9.99999974E-6 : f32
    %209 = vector.broadcast %cst_79 : f32 to vector<1x4x1xf32>
    %210 = arith.addf %206, %209 : vector<1x4x1xf32>
    %211 = math.rsqrt %210 : vector<1x4x1xf32>
    %212 = vector.broadcast %211 : vector<1x4x1xf32> to vector<2x4x16xf32>
    %213 = arith.mulf %208, %212 : vector<2x4x16xf32>
    %214 = vector.shape_cast %161 : vector<4x1xf32> to vector<1x4x1xf32>
    %215 = vector.broadcast %214 : vector<1x4x1xf32> to vector<2x4x16xf32>
    %216 = arith.mulf %213, %215 : vector<2x4x16xf32>
    %217 = vector.shape_cast %162 : vector<4x1xf32> to vector<1x4x1xf32>
    %218 = vector.broadcast %217 : vector<1x4x1xf32> to vector<2x4x16xf32>
    %219 = arith.addf %216, %218 : vector<2x4x16xf32>
    %cst_80 = arith.constant 0.000000e+00 : f32
    %220 = vector.broadcast %cst_80 : f32 to vector<2x4x16xf32>
    %221 = arith.maximumf %219, %220 : vector<2x4x16xf32>
    %222 = arith.addf %221, %159 : vector<2x4x16xf32>
    %cst_81 = arith.constant 0.000000e+00 : f32
    %223 = vector.broadcast %cst_81 : f32 to vector<2x4x16xf32>
    %224 = arith.maximumf %222, %223 : vector<2x4x16xf32>
    %c0_82 = arith.constant 0 : index
    %225 = memref.load %arg13[%c0_82] : memref<4xf32, #tpu.memory_space<smem>>
    %c1 = arith.constant 1 : index
    %226 = memref.load %arg13[%c1] : memref<4xf32, #tpu.memory_space<smem>>
    %c2 = arith.constant 2 : index
    %227 = memref.load %arg13[%c2] : memref<4xf32, #tpu.memory_space<smem>>
    %c3 = arith.constant 3 : index
    %228 = memref.load %arg13[%c3] : memref<4xf32, #tpu.memory_space<smem>>
    %229 = vector.broadcast %225 : f32 to vector<2x4x16xf32>
    %230 = arith.mulf %229, %224 : vector<2x4x16xf32>
    %231 = vector.broadcast %226 : f32 to vector<2x4x16xf32>
    %232 = arith.mulf %231, %94 : vector<2x4x16xf32>
    %233 = arith.addf %230, %232 : vector<2x4x16xf32>
    %234 = math.tanh %233 : vector<2x4x16xf32>
    %235 = vector.broadcast %227 : f32 to vector<2x4x16xf32>
    %236 = arith.mulf %235, %224 : vector<2x4x16xf32>
    %237 = vector.broadcast %228 : f32 to vector<2x4x16xf32>
    %238 = arith.mulf %237, %94 : vector<2x4x16xf32>
    %239 = arith.addf %236, %238 : vector<2x4x16xf32>
    %240 = arith.negf %239 : vector<2x4x16xf32>
    %241 = math.exp %240 : vector<2x4x16xf32>
    %cst_83 = arith.constant 1.000000e+00 : f32
    %242 = vector.broadcast %cst_83 : f32 to vector<2x4x16xf32>
    %243 = arith.addf %242, %241 : vector<2x4x16xf32>
    %244 = arith.divf %242, %243 : vector<2x4x16xf32>
    %245 = arith.mulf %234, %244 : vector<2x4x16xf32>
    %246 = arith.addf %245, %0 : vector<2x4x16xf32>
    %c0_84 = arith.constant 0 : index
    %c0_85 = arith.constant 0 : index
    %247 = vector.load %arg14[%c0_84, %c0_85] : memref<4x16xf32, #tpu.memory_space<vmem>>, vector<4x16xf32>
    %248 = vector.shape_cast %247 : vector<4x16xf32> to vector<1x4x16xf32>
    %249 = vector.broadcast %248 : vector<1x4x16xf32> to vector<2x4x16xf32>
    %250 = arith.mulf %246, %249 : vector<2x4x16xf32>
    %cst_86 = arith.constant dense<0.000000e+00> : vector<2x4xf32>
    %251 = vector.multi_reduction <add>, %250, %cst_86 [2] : vector<2x4x16xf32> to vector<2x4xf32>
    %252 = vector.shape_cast %251 : vector<2x4xf32> to vector<2x4x1xf32>
    %cst_87 = arith.constant dense<0.000000e+00> : vector<2x1xf32>
    %253 = vector.multi_reduction <add>, %252, %cst_87 [1] : vector<2x4x1xf32> to vector<2x1xf32>
    %c0_88 = arith.constant 0 : index
    %254 = memref.load %arg15[%c0_88] : memref<1xf32, #tpu.memory_space<smem>>
    %255 = vector.broadcast %254 : f32 to vector<2x1xf32>
    %256 = arith.addf %253, %255 : vector<2x1xf32>
    %c0_89 = arith.constant 0 : index
    %c0_90 = arith.constant 0 : index
    %257 = vector.load %arg16[%c0_89, %c0_90] : memref<2x1xf32, #tpu.memory_space<vmem>>, vector<2x1xf32>
    tpu.vector_store %arg16[%c0_89, %c0_90], %256 {strides = array<i32>} : memref<2x1xf32, #tpu.memory_space<vmem>>, vector<2x1xf32>,
    return
  }
}

</mosaic_0001>

<llo_original>
// kernel: tpu_custom_call.1
$region0: #{tpu_custom_call.1}
  #allocation0 [shape = 'u32[]', space=smem, size = 0x4, offset = 0x4, fixed_abs, tag = 'smem constant byte address 0x4 - core index']
  #allocation1 [shape = 'u32[144,128]{1,0:T(1,128)}', space=vmem, size = 0x12000, scoped, tag = 'internal scratch']
  #allocation2 [shape = 'f32[1]{0:T(128)S(6)}', space=smem, size = 0x200, scoped, tag = 'scoped memory for tpu_custom_call.1']
  %s0 = inlined_call_operand.hbm [shape: f32[2,4,16], index: 0, kind: input, shape index: {}]
  %s1 = inlined_call_operand.vmem [shape: f32[16,16], index: 1, kind: input, shape index: {}]
  %s2 = inlined_call_operand.vmem [shape: f32[1,16], index: 2, kind: input, shape index: {}]
  %s3 = inlined_call_operand.vmem [shape: f32[3,4,4], index: 3, kind: input, shape index: {}]
  %s4 = inlined_call_operand.vmem [shape: f32[4,1], index: 4, kind: input, shape index: {}]
  %s5 = inlined_call_operand.vmem [shape: f32[4,1], index: 5, kind: input, shape index: {}]
  %s6 = inlined_call_operand.vmem [shape: f32[4,1], index: 6, kind: input, shape index: {}]
  %s7 = inlined_call_operand.vmem [shape: f32[3,4,4], index: 7, kind: input, shape index: {}]
  %s8 = inlined_call_operand.vmem [shape: f32[4,1], index: 8, kind: input, shape index: {}]
  %s9 = inlined_call_operand.vmem [shape: f32[4,1], index: 9, kind: input, shape index: {}]
  %s10 = inlined_call_operand.vmem [shape: f32[3,4,4], index: 10, kind: input, shape index: {}]
  %s11 = inlined_call_operand.vmem [shape: f32[4,1], index: 11, kind: input, shape index: {}]
  %s12 = inlined_call_operand.vmem [shape: f32[4,1], index: 12, kind: input, shape index: {}]
  %s13 = inlined_call_operand.vmem [shape: f32[4], index: 13, kind: input, shape index: {}]
  %s14 = inlined_call_operand.vmem [shape: f32[4,16], index: 14, kind: input, shape index: {}]
  %s15 = inlined_call_operand.<no memory space> [shape: f32[1], index: 15, kind: input, shape index: {}]
  %s16 = inlined_call_operand.vmem [shape: f32[2,1], index: 16, kind: output, shape index: {}]
  %s17 = sld [smem:[#allocation0]]
  $region82: #{tpu_custom_call.1} parent=0
    _
  %s19 = ssub.s32 1, %s17
  %s20 = scalar_select 0, %s19, %s17
  %21 = sst [smem:[#allocation2]] %s15
  $region1: #{tpu_custom_call.1} parent=0
    #allocation3 [shape = 'u8[4096]{0}', space=vmem, size = 0x1000, scoped, tag = 'input window, operand 0, single buffered']
    #allocation4 [shape = 's32[1]{0}', space=sflag, size = 0x4, scoped, tag = 'scoped memory for tpu_custom_call.1']
    #allocation5 [shape = 's32[1]{0}', space=sflag, size = 0x4, scoped, tag = 'scoped memory for tpu_custom_call.1']
    #allocation6 [shape = 'u8[512]{0}', space=smem, size = 0x200, scoped, tag = 'input window, operand 13, single buffered']
    %22 = vsyncpa [#allocation4], 0
    %23 = vsyncpa [#allocation5], 0
    // Predicated region
    $region2: #{tpu_custom_call.1} parent=1 // pred_check
      _
    $region3: #{tpu_custom_call.1} parent=1 // pred_check_branch
      %25 = sbr.rel (0) target = $region5
    $region4: #{tpu_custom_call.1} parent=1 // pred_region
      %s27 = ssub.s32 128, 128
      %28 = vsyncadd [#allocation4], %s27
      %s29 = sshll.u32 [#allocation3], 4
      %s30 = int_to_ptr.vmem [resolvable:$true] %s29
      %35 = dma.hbm_to_vmem [thread:$0]  %s0, 128, %s30, [#allocation4], 64, 64, 4
    $region5: #{tpu_custom_call.1} parent=1 // pred_fallthru
      _
    // Predicated region
    $region6: #{tpu_custom_call.1} parent=1 // pred_check
      _
    $region7: #{tpu_custom_call.1} parent=1 // pred_check_branch
      %37 = sbr.rel (0) target = $region9
    $region8: #{tpu_custom_call.1} parent=1 // pred_region
      _
    $region9: #{tpu_custom_call.1} parent=1 // pred_fallthru
      _
    // Predicated region
    $region10: #{tpu_custom_call.1} parent=1 // pred_check
      _
    $region11: #{tpu_custom_call.1} parent=1 // pred_check_branch
      %39 = sbr.rel (0) target = $region13
    $region12: #{tpu_custom_call.1} parent=1 // pred_region
      _
    $region13: #{tpu_custom_call.1} parent=1 // pred_fallthru
      _
    // Predicated region
    $region14: #{tpu_custom_call.1} parent=1 // pred_check
      _
    $region15: #{tpu_custom_call.1} parent=1 // pred_check_branch
      %41 = sbr.rel (0) target = $region17
    $region16: #{tpu_custom_call.1} parent=1 // pred_region
      _
    $region17: #{tpu_custom_call.1} parent=1 // pred_fallthru
      _
    // Predicated region
    $region18: #{tpu_custom_call.1} parent=1 // pred_check
      _
    $region19: #{tpu_custom_call.1} parent=1 // pred_check_branch
      %43 = sbr.rel (0) target = $region21
    $region20: #{tpu_custom_call.1} parent=1 // pred_region
      _
    $region21: #{tpu_custom_call.1} parent=1 // pred_fallthru
      _
    // Predicated region
    $region22: #{tpu_custom_call.1} parent=1 // pred_check
      _
    $region23: #{tpu_custom_call.1} parent=1 // pred_check_branch
      %45 = sbr.rel (0) target = $region25
    $region24: #{tpu_custom_call.1} parent=1 // pred_region
      _
    $region25: #{tpu_custom_call.1} parent=1 // pred_fallthru
      _
    // Predicated region
    $region26: #{tpu_custom_call.1} parent=1 // pred_check
      _
    $region27: #{tpu_custom_call.1} parent=1 // pred_check_branch
      %47 = sbr.rel (0) target = $region29
    $region28: #{tpu_custom_call.1} parent=1 // pred_region
      _
    $region29: #{tpu_custom_call.1} parent=1 // pred_fallthru
      _
    // Predicated region
    $region30: #{tpu_custom_call.1} parent=1 // pred_check
      _
    $region31: #{tpu_custom_call.1} parent=1 // pred_check_branch
      %49 = sbr.rel (0) target = $region33
    $region32: #{tpu_custom_call.1} parent=1 // pred_region
      _
    $region33: #{tpu_custom_call.1} parent=1 // pred_fallthru
      _
    // Predicated region
    $region34: #{tpu_custom_call.1} parent=1 // pred_check
      _
    $region35: #{tpu_custom_call.1} parent=1 // pred_check_branch
      %51 = sbr.rel (0) target = $region37
    $region36: #{tpu_custom_call.1} parent=1 // pred_region
      _
    $region37: #{tpu_custom_call.1} parent=1 // pred_fallthru
      _
    // Predicated region
    $region38: #{tpu_custom_call.1} parent=1 // pred_check
      _
    $region39: #{tpu_custom_call.1} parent=1 // pred_check_branch
      %53 = sbr.rel (0) target = $region41
    $region40: #{tpu_custom_call.1} parent=1 // pred_region
      _
    $region41: #{tpu_custom_call.1} parent=1 // pred_fallthru
      _
    // Predicated region
    $region42: #{tpu_custom_call.1} parent=1 // pred_check
      _
    $region43: #{tpu_custom_call.1} parent=1 // pred_check_branch
      %55 = sbr.rel (0) target = $region45
    $region44: #{tpu_custom_call.1} parent=1 // pred_region
      _
    $region45: #{tpu_custom_call.1} parent=1 // pred_fallthru
      _
    // Predicated region
    $region46: #{tpu_custom_call.1} parent=1 // pred_check
      _
    $region47: #{tpu_custom_call.1} parent=1 // pred_check_branch
      %57 = sbr.rel (0) target = $region49
    $region48: #{tpu_custom_call.1} parent=1 // pred_region
      _
    $region49: #{tpu_custom_call.1} parent=1 // pred_fallthru
      _
    // Predicated region
    $region50: #{tpu_custom_call.1} parent=1 // pred_check
      _
    $region51: #{tpu_custom_call.1} parent=1 // pred_check_branch
      %59 = sbr.rel (0) target = $region53
    $region52: #{tpu_custom_call.1} parent=1 // pred_region
      _
    $region53: #{tpu_custom_call.1} parent=1 // pred_fallthru
      _
    // Predicated region
    $region54: #{tpu_custom_call.1} parent=1 // pred_check
      _
    $region55: #{tpu_custom_call.1} parent=1 // pred_check_branch
      %61 = sbr.rel (0) target = $region57
    $region56: #{tpu_custom_call.1} parent=1 // pred_region
      %s63 = ssub.s32 16, 16
      %64 = vsyncadd [#allocation5], %s63
      %s66 = sshll.u32 %s13, 4
      %s67 = int_to_ptr.vmem [resolvable:$true] %s66
      %69 = dma.vmem_to_smem %s67, 16, [#allocation6], [#allocation5]
    $region57: #{tpu_custom_call.1} parent=1 // pred_fallthru
      _
    // Predicated region
    $region58: #{tpu_custom_call.1} parent=1 // pred_check
      _
    $region59: #{tpu_custom_call.1} parent=1 // pred_check_branch
      %71 = sbr.rel (0) target = $region61
    $region60: #{tpu_custom_call.1} parent=1 // pred_region
      _
    $region61: #{tpu_custom_call.1} parent=1 // pred_fallthru
      _
    // Predicated region
    $region62: #{tpu_custom_call.1} parent=1 // pred_check
      _
    $region63: #{tpu_custom_call.1} parent=1 // pred_check_branch
      %73 = sbr.rel (0) target = $region65
    $region64: #{tpu_custom_call.1} parent=1 // pred_region
      _
    $region65: #{tpu_custom_call.1} parent=1 // pred_fallthru
      _
    // Predicated region
    $region66: #{tpu_custom_call.1} parent=1 // pred_check
      _
    $region67: #{tpu_custom_call.1} parent=1 // pred_check_branch
      %75 = sbr.rel (0) target = $region69
    $region68: #{tpu_custom_call.1} parent=1 // pred_region
      %76 = dma.done [#allocation4], 128
    $region69: #{tpu_custom_call.1} parent=1 // pred_fallthru
      _
    // Predicated region
    $region70: #{tpu_custom_call.1} parent=1 // pred_check
      _
    $region71: #{tpu_custom_call.1} parent=1 // pred_check_branch
      %78 = sbr.rel (0) target = $region73
    $region72: #{tpu_custom_call.1} parent=1 // pred_region
      %79 = dma.done [#allocation5], 16
    $region73: #{tpu_custom_call.1} parent=1 // pred_fallthru
      _
    %80 = sfence
    %v81 = vld [vmem:[#allocation3] sm:$0xf]
    %v82 = vld [vmem:[#allocation3 + $0x4] sm:$0xf]
    %vm83 = vcmask 125952
    %v84 = vsel %vm83, %v81, 0.0
    %85 = vadd.xlane.f32.xlu0 %v84
    %v86 = vpop.xlane.xlu0 %85
    %v87 = vsel %vm83, %v82, 0.0
    %88 = vadd.xlane.f32.xlu0 %v87
    %v89 = vpop.xlane.xlu0 %88
    %v90 = vrcp.pop 16.0
    %v91 = vmul.f32 %v86, %v90
    %v92 = vmul.f32 %v89, %v90
    %v93 = vsub.f32 %v81, %v91
    %v94 = vsub.f32 %v82, %v92
    %v95 = vmul.f32 %v93, %v93
    %v96 = vmul.f32 %v94, %v94
    %v97 = vsel %vm83, %v95, 0.0
    %98 = vadd.xlane.f32.xlu0 %v97
    %v99 = vpop.xlane.xlu0 %98
    %v100 = vsel %vm83, %v96, 0.0
    %101 = vadd.xlane.f32.xlu0 %v100
    %v102 = vpop.xlane.xlu0 %101
    %v103 = vadd.f32 %v99, 1e-12
    %v104 = vadd.f32 %v102, 1e-12
    %v105 = vrsqrt.pop %v103
    %v106 = vrsqrt.pop %v104
    %v107 = vmul.f32 %v93, %v105
    %v108 = vmul.f32 %v94, %v106
    %vm109 = vcmask 130048
    %v111 = vsel %vm109, %v107, 0
    %113 = vmatprep.subr.mxu0 0.0
    %114 = vmatpush1.xpose.msra.mxu0 %v111
    %115 = vmatprep.subr.mxu0 0.0
    %116 = vmatpush1.xpose.msra.mxu0 0.0
    %117 = vmatprep.subr.mxu0 0.0
    %118 = vmatpush1.xpose.msra.mxu0 0.0
    %119 = vmatprep.subr.mxu0 0.0
    %120 = vmatpush1.xpose.msra.mxu0 0.0
    %121 = vmatprep.subr.mxu0 0.0
    %122 = vmatpush1.xpose.msra.mxu0 0.0
    %123 = vmatprep.subr.mxu0 0.0
    %124 = vmatpush1.xpose.msra.mxu0 0.0
    %125 = vmatprep.subr.mxu0 0.0
    %126 = vmatpush1.xpose.msra.mxu0 0.0
    %127 = vmatprep.subr.mxu0 0.0
    %128 = vmatpush1.xpose.msra.mxu0 0.0
    %129 = vmatprep.subr.mxu0 0.0
    %130 = vmatpush1.xpose.msra.mxu0 0.0
    %131 = vmatprep.subr.mxu0 0.0
    %132 = vmatpush1.xpose.msra.mxu0 0.0
    %133 = vmatprep.subr.mxu0 0.0
    %134 = vmatpush1.xpose.msra.mxu0 0.0
    %135 = vmatprep.subr.mxu0 0.0
    %136 = vmatpush1.xpose.msra.mxu0 0.0
    %137 = vmatprep.subr.mxu0 0.0
    %138 = vmatpush1.xpose.msra.mxu0 0.0
    %139 = vmatprep.subr.mxu0 0.0
    %140 = vmatpush1.xpose.msra.mxu0 0.0
    %141 = vmatprep.subr.mxu0 0.0
    %142 = vmatpush1.xpose.msra.mxu0 0.0
    %143 = vmatprep.subr.mxu0 0.0
    %144 = vmatpush1.xpose.msra.mxu0 0.0
    %145 = vmatprep.subr.mxu0 0.0
    %146 = vmatpush1.xpose.msra.mxu0 0.0
    %147 = vmatprep.subr.mxu0 0.0
    %148 = vmatpush1.xpose.msra.mxu0 0.0
    %149 = vmatprep.subr.mxu0 0.0
    %150 = vmatpush1.xpose.msra.mxu0 0.0
    %151 = vmatprep.subr.mxu0 0.0
    %152 = vmatpush1.xpose.msra.mxu0 0.0
    %153 = vmatprep.subr.mxu0 0.0
    %154 = vmatpush1.xpose.msra.mxu0 0.0
    %155 = vmatprep.subr.mxu0 0.0
    %156 = vmatpush1.xpose.msra.mxu0 0.0
    %157 = vmatprep.subr.mxu0 0.0
    %158 = vmatpush1.xpose.msra.mxu0 0.0
    %159 = vmatprep.subr.mxu0 0.0
    %160 = vmatpush1.xpose.msra.mxu0 0.0
    %161 = vmatprep.subr.mxu0 0.0
    %162 = vmatpush1.xpose.msra.mxu0 0.0
    %163 = vmatprep.subr.mxu0 0.0
    %164 = vmatpush1.xpose.msra.mxu0 0.0
    %165 = vmatprep.subr.mxu0 0.0
    %166 = vmatpush1.xpose.msra.mxu0 0.0
    %167 = vmatprep.subr.mxu0 0.0
    %168 = vmatpush1.xpose.msra.mxu0 0.0
    %169 = vmatprep.subr.mxu0 0.0
    %170 = vmatpush1.xpose.msra.mxu0 0.0
    %171 = vmatprep.subr.mxu0 0.0
    %172 = vmatpush1.xpose.msra.mxu0 0.0
    %173 = vmatprep.subr.mxu0 0.0
    %174 = vmatpush1.xpose.msra.mxu0 0.0
    %175 = vmatprep.subr.mxu0 0.0
    %176 = vmatpush1.xpose.msra.mxu0 0.0
    %177 = vmatprep.mubr.f32.mxu0 0.0
    %178 = vmatmul.mubr.f32.gmra.mrb[0].mxu0 %v111
    %v179 = vpop.f32.mrb[0].mxu0
    %v180 = vadd.f32 0.0, %v179
    %v181 = vpop.f32.mrb[0].mxu0
    %182 = vdwg.mxu0
    %v184 = vsel %vm109, %v108, 0
    %186 = vmatprep.subr.mxu0 0.0
    %187 = vmatpush1.xpose.msra.mxu0 %v184
    %188 = vmatprep.subr.mxu0 0.0
    %189 = vmatpush1.xpose.msra.mxu0 0.0
    %190 = vmatprep.subr.mxu0 0.0
    %191 = vmatpush1.xpose.msra.mxu0 0.0
    %192 = vmatprep.subr.mxu0 0.0
    %193 = vmatpush1.xpose.msra.mxu0 0.0
    %194 = vmatprep.subr.mxu0 0.0
    %195 = vmatpush1.xpose.msra.mxu0 0.0
    %196 = vmatprep.subr.mxu0 0.0
    %197 = vmatpush1.xpose.msra.mxu0 0.0
    %198 = vmatprep.subr.mxu0 0.0
    %199 = vmatpush1.xpose.msra.mxu0 0.0
    %200 = vmatprep.subr.mxu0 0.0
    %201 = vmatpush1.xpose.msra.mxu0 0.0
    %202 = vmatprep.subr.mxu0 0.0
    %203 = vmatpush1.xpose.msra.mxu0 0.0
    %204 = vmatprep.subr.mxu0 0.0
    %205 = vmatpush1.xpose.msra.mxu0 0.0
    %206 = vmatprep.subr.mxu0 0.0
    %207 = vmatpush1.xpose.msra.mxu0 0.0
    %208 = vmatprep.subr.mxu0 0.0
    %209 = vmatpush1.xpose.msra.mxu0 0.0
    %210 = vmatprep.subr.mxu0 0.0
    %211 = vmatpush1.xpose.msra.mxu0 0.0
    %212 = vmatprep.subr.mxu0 0.0
    %213 = vmatpush1.xpose.msra.mxu0 0.0
    %214 = vmatprep.subr.mxu0 0.0
    %215 = vmatpush1.xpose.msra.mxu0 0.0
    %216 = vmatprep.subr.mxu0 0.0
    %217 = vmatpush1.xpose.msra.mxu0 0.0
    %218 = vmatprep.subr.mxu0 0.0
    %219 = vmatpush1.xpose.msra.mxu0 0.0
    %220 = vmatprep.subr.mxu0 0.0
    %221 = vmatpush1.xpose.msra.mxu0 0.0
    %222 = vmatprep.subr.mxu0 0.0
    %223 = vmatpush1.xpose.msra.mxu0 0.0
    %224 = vmatprep.subr.mxu0 0.0
    %225 = vmatpush1.xpose.msra.mxu0 0.0
    %226 = vmatprep.subr.mxu0 0.0
    %227 = vmatpush1.xpose.msra.mxu0 0.0
    %228 = vmatprep.subr.mxu0 0.0
    %229 = vmatpush1.xpose.msra.mxu0 0.0
    %230 = vmatprep.subr.mxu0 0.0
    %231 = vmatpush1.xpose.msra.mxu0 0.0
    %232 = vmatprep.subr.mxu0 0.0
    %233 = vmatpush1.xpose.msra.mxu0 0.0
    %234 = vmatprep.subr.mxu0 0.0
    %235 = vmatpush1.xpose.msra.mxu0 0.0
    %236 = vmatprep.subr.mxu0 0.0
    %237 = vmatpush1.xpose.msra.mxu0 0.0
    %238 = vmatprep.subr.mxu0 0.0
    %239 = vmatpush1.xpose.msra.mxu0 0.0
    %240 = vmatprep.subr.mxu0 0.0
    %241 = vmatpush1.xpose.msra.mxu0 0.0
    %242 = vmatprep.subr.mxu0 0.0
    %243 = vmatpush1.xpose.msra.mxu0 0.0
    %244 = vmatprep.subr.mxu0 0.0
    %245 = vmatpush1.xpose.msra.mxu0 0.0
    %246 = vmatprep.subr.mxu0 0.0
    %247 = vmatpush1.xpose.msra.mxu0 0.0
    %248 = vmatprep.subr.mxu0 0.0
    %249 = vmatpush1.xpose.msra.mxu0 0.0
    %250 = vmatprep.mubr.f32.mxu0 0.0
    %251 = vmatmul.mubr.f32.gmra.mrb[0].mxu0 %v184
    %v252 = vpop.f32.mrb[0].mxu0
    %v253 = vadd.f32 0.0, %v252
    %v254 = vpop.f32.mrb[0].mxu0
    %255 = vdwg.mxu0
    %vm256 = vcmask 31744
    %v258 = vsel %vm256, %v180, 0
    %vm260 = vcmask 1043456
    %v262 = vsel %vm260, %v81, 0
    %264 = vmatprep.subr.mxu0 0.0
    %265 = vmatpush1.msra.mxu0 %v262
    %266 = vmatprep.subr.mxu0 0.0
    %267 = vmatpush1.msra.mxu0 0.0
    %268 = vmatprep.subr.mxu0 0.0
    %269 = vmatpush1.msra.mxu0 0.0
    %270 = vmatprep.subr.mxu0 0.0
    %271 = vmatpush1.msra.mxu0 0.0
    %272 = vmatprep.subr.mxu0 0.0
    %273 = vmatpush1.msra.mxu0 0.0
    %274 = vmatprep.subr.mxu0 0.0
    %275 = vmatpush1.msra.mxu0 0.0
    %276 = vmatprep.subr.mxu0 0.0
    %277 = vmatpush1.msra.mxu0 0.0
    %278 = vmatprep.subr.mxu0 0.0
    %279 = vmatpush1.msra.mxu0 0.0
    %280 = vmatprep.subr.mxu0 0.0
    %281 = vmatpush1.msra.mxu0 0.0
    %282 = vmatprep.subr.mxu0 0.0
    %283 = vmatpush1.msra.mxu0 0.0
    %284 = vmatprep.subr.mxu0 0.0
    %285 = vmatpush1.msra.mxu0 0.0
    %286 = vmatprep.subr.mxu0 0.0
    %287 = vmatpush1.msra.mxu0 0.0
    %288 = vmatprep.subr.mxu0 0.0
    %289 = vmatpush1.msra.mxu0 0.0
    %290 = vmatprep.subr.mxu0 0.0
    %291 = vmatpush1.msra.mxu0 0.0
    %292 = vmatprep.subr.mxu0 0.0
    %293 = vmatpush1.msra.mxu0 0.0
    %294 = vmatprep.subr.mxu0 0.0
    %295 = vmatpush1.msra.mxu0 0.0
    %296 = vmatprep.subr.mxu0 0.0
    %297 = vmatpush1.msra.mxu0 0.0
    %298 = vmatprep.subr.mxu0 0.0
    %299 = vmatpush1.msra.mxu0 0.0
    %300 = vmatprep.subr.mxu0 0.0
    %301 = vmatpush1.msra.mxu0 0.0
    %302 = vmatprep.subr.mxu0 0.0
    %303 = vmatpush1.msra.mxu0 0.0
    %304 = vmatprep.subr.mxu0 0.0
    %305 = vmatpush1.msra.mxu0 0.0
    %306 = vmatprep.subr.mxu0 0.0
    %307 = vmatpush1.msra.mxu0 0.0
    %308 = vmatprep.subr.mxu0 0.0
    %309 = vmatpush1.msra.mxu0 0.0
    %310 = vmatprep.subr.mxu0 0.0
    %311 = vmatpush1.msra.mxu0 0.0
    %312 = vmatprep.subr.mxu0 0.0
    %313 = vmatpush1.msra.mxu0 0.0
    %314 = vmatprep.subr.mxu0 0.0
    %315 = vmatpush1.msra.mxu0 0.0
    %316 = vmatprep.subr.mxu0 0.0
    %317 = vmatpush1.msra.mxu0 0.0
    %318 = vmatprep.subr.mxu0 0.0
    %319 = vmatpush1.msra.mxu0 0.0
    %320 = vmatprep.subr.mxu0 0.0
    %321 = vmatpush1.msra.mxu0 0.0
    %322 = vmatprep.subr.mxu0 0.0
    %323 = vmatpush1.msra.mxu0 0.0
    %324 = vmatprep.subr.mxu0 0.0
    %325 = vmatpush1.msra.mxu0 0.0
    %326 = vmatprep.subr.mxu0 0.0
    %327 = vmatpush1.msra.mxu0 0.0
    %328 = vmatprep.mubr.f32.mxu0 0.0
    %329 = vmatmul.mubr.f32.gmra.mrb[0].mxu0 %v258
    %v330 = vpop.f32.mrb[0].mxu0
    %v331 = vadd.f32 0.0, %v330
    %v332 = vpop.f32.mrb[0].mxu0
    %333 = vdwg.mxu0
    %v335 = vsel %vm256, %v253, 0
    %v338 = vsel %vm260, %v82, 0
    %340 = vmatprep.subr.mxu0 0.0
    %341 = vmatpush1.msra.mxu0 %v338
    %342 = vmatprep.subr.mxu0 0.0
    %343 = vmatpush1.msra.mxu0 0.0
    %344 = vmatprep.subr.mxu0 0.0
    %345 = vmatpush1.msra.mxu0 0.0
    %346 = vmatprep.subr.mxu0 0.0
    %347 = vmatpush1.msra.mxu0 0.0
    %348 = vmatprep.subr.mxu0 0.0
    %349 = vmatpush1.msra.mxu0 0.0
    %350 = vmatprep.subr.mxu0 0.0
    %351 = vmatpush1.msra.mxu0 0.0
    %352 = vmatprep.subr.mxu0 0.0
    %353 = vmatpush1.msra.mxu0 0.0
    %354 = vmatprep.subr.mxu0 0.0
    %355 = vmatpush1.msra.mxu0 0.0
    %356 = vmatprep.subr.mxu0 0.0
    %357 = vmatpush1.msra.mxu0 0.0
    %358 = vmatprep.subr.mxu0 0.0
    %359 = vmatpush1.msra.mxu0 0.0
    %360 = vmatprep.subr.mxu0 0.0
    %361 = vmatpush1.msra.mxu0 0.0
    %362 = vmatprep.subr.mxu0 0.0
    %363 = vmatpush1.msra.mxu0 0.0
    %364 = vmatprep.subr.mxu0 0.0
    %365 = vmatpush1.msra.mxu0 0.0
    %366 = vmatprep.subr.mxu0 0.0
    %367 = vmatpush1.msra.mxu0 0.0
    %368 = vmatprep.subr.mxu0 0.0
    %369 = vmatpush1.msra.mxu0 0.0
    %370 = vmatprep.subr.mxu0 0.0
    %371 = vmatpush1.msra.mxu0 0.0
    %372 = vmatprep.subr.mxu0 0.0
    %373 = vmatpush1.msra.mxu0 0.0
    %374 = vmatprep.subr.mxu0 0.0
    %375 = vmatpush1.msra.mxu0 0.0
    %376 = vmatprep.subr.mxu0 0.0
    %377 = vmatpush1.msra.mxu0 0.0
    %378 = vmatprep.subr.mxu0 0.0
    %379 = vmatpush1.msra.mxu0 0.0
    %380 = vmatprep.subr.mxu0 0.0
    %381 = vmatpush1.msra.mxu0 0.0
    %382 = vmatprep.subr.mxu0 0.0
    %383 = vmatpush1.msra.mxu0 0.0
    %384 = vmatprep.subr.mxu0 0.0
    %385 = vmatpush1.msra.mxu0 0.0
    %386 = vmatprep.subr.mxu0 0.0
    %387 = vmatpush1.msra.mxu0 0.0
    %388 = vmatprep.subr.mxu0 0.0
    %389 = vmatpush1.msra.mxu0 0.0
    %390 = vmatprep.subr.mxu0 0.0
    %391 = vmatpush1.msra.mxu0 0.0
    %392 = vmatprep.subr.mxu0 0.0
    %393 = vmatpush1.msra.mxu0 0.0
    %394 = vmatprep.subr.mxu0 0.0
    %395 = vmatpush1.msra.mxu0 0.0
    %396 = vmatprep.subr.mxu0 0.0
    %397 = vmatpush1.msra.mxu0 0.0
    %398 = vmatprep.subr.mxu0 0.0
    %399 = vmatpush1.msra.mxu0 0.0
    %400 = vmatprep.subr.mxu0 0.0
    %401 = vmatpush1.msra.mxu0 0.0
    %402 = vmatprep.subr.mxu0 0.0
    %403 = vmatpush1.msra.mxu0 0.0
    %404 = vmatprep.mubr.f32.mxu0 0.0
    %405 = vmatmul.mubr.f32.gmra.mrb[0].mxu0 %v335
    %v406 = vpop.f32.mrb[0].mxu0
    %v407 = vadd.f32 0.0, %v406
    %v408 = vpop.f32.mrb[0].mxu0
    %409 = vdwg.mxu0
    %v410 = vld [vmem:[%s1] sm:$0xff]
    %v411 = vld [vmem:[%s1 + $0x8] sm:$0xff]
    %v412 = vld [vmem:[%s2] sm:$0x1]
    %v414 = vlaneseq
    %v415 = vshrl.u32 %v414, 7
    %v416 = vsub.s32 0, %v415
    %v417 = vrot.slane %v412, %v416
    %v420 = vcombine.low %v331, %v407
    %v421 = vcombine.low %v417, %v417
    %v423 = vsel %vm109, %v420, 0
    %v426 = vsel %vm109, %v410, 0
    %v429 = vsel %vm109, %v411, 0
    %431 = vmatprep.subr.mxu0 0.0
    %432 = vmatpush1.xpose.msra.mxu0 %v426
    %433 = vmatprep.subr.mxu0 0.0
    %434 = vmatpush1.xpose.msra.mxu0 %v429
    %435 = vmatprep.subr.mxu0 0.0
    %436 = vmatpush1.xpose.msra.mxu0 0.0
    %437 = vmatprep.subr.mxu0 0.0
    %438 = vmatpush1.xpose.msra.mxu0 0.0
    %439 = vmatprep.subr.mxu0 0.0
    %440 = vmatpush1.xpose.msra.mxu0 0.0
    %441 = vmatprep.subr.mxu0 0.0
    %442 = vmatpush1.xpose.msra.mxu0 0.0
    %443 = vmatprep.subr.mxu0 0.0
    %444 = vmatpush1.xpose.msra.mxu0 0.0
    %445 = vmatprep.subr.mxu0 0.0
    %446 = vmatpush1.xpose.msra.mxu0 0.0
    %447 = vmatprep.subr.mxu0 0.0
    %448 = vmatpush1.xpose.msra.mxu0 0.0
    %449 = vmatprep.subr.mxu0 0.0
    %450 = vmatpush1.xpose.msra.mxu0 0.0
    %451 = vmatprep.subr.mxu0 0.0
    %452 = vmatpush1.xpose.msra.mxu0 0.0
    %453 = vmatprep.subr.mxu0 0.0
    %454 = vmatpush1.xpose.msra.mxu0 0.0
    %455 = vmatprep.subr.mxu0 0.0
    %456 = vmatpush1.xpose.msra.mxu0 0.0
    %457 = vmatprep.subr.mxu0 0.0
    %458 = vmatpush1.xpose.msra.mxu0 0.0
    %459 = vmatprep.subr.mxu0 0.0
    %460 = vmatpush1.xpose.msra.mxu0 0.0
    %461 = vmatprep.subr.mxu0 0.0
    %462 = vmatpush1.xpose.msra.mxu0 0.0
    %463 = vmatprep.subr.mxu0 0.0
    %464 = vmatpush1.xpose.msra.mxu0 0.0
    %465 = vmatprep.subr.mxu0 0.0
    %466 = vmatpush1.xpose.msra.mxu0 0.0
    %467 = vmatprep.subr.mxu0 0.0
    %468 = vmatpush1.xpose.msra.mxu0 0.0
    %469 = vmatprep.subr.mxu0 0.0
    %470 = vmatpush1.xpose.msra.mxu0 0.0
    %471 = vmatprep.subr.mxu0 0.0
    %472 = vmatpush1.xpose.msra.mxu0 0.0
    %473 = vmatprep.subr.mxu0 0.0
    %474 = vmatpush1.xpose.msra.mxu0 0.0
    %475 = vmatprep.subr.mxu0 0.0
    %476 = vmatpush1.xpose.msra.mxu0 0.0
    %477 = vmatprep.subr.mxu0 0.0
    %478 = vmatpush1.xpose.msra.mxu0 0.0
    %479 = vmatprep.subr.mxu0 0.0
    %480 = vmatpush1.xpose.msra.mxu0 0.0
    %481 = vmatprep.subr.mxu0 0.0
    %482 = vmatpush1.xpose.msra.mxu0 0.0
    %483 = vmatprep.subr.mxu0 0.0
    %484 = vmatpush1.xpose.msra.mxu0 0.0
    %485 = vmatprep.subr.mxu0 0.0
    %486 = vmatpush1.xpose.msra.mxu0 0.0
    %487 = vmatprep.subr.mxu0 0.0
    %488 = vmatpush1.xpose.msra.mxu0 0.0
    %489 = vmatprep.subr.mxu0 0.0
    %490 = vmatpush1.xpose.msra.mxu0 0.0
    %491 = vmatprep.subr.mxu0 0.0
    %492 = vmatpush1.xpose.msra.mxu0 0.0
    %493 = vmatprep.subr.mxu0 0.0
    %494 = vmatpush1.xpose.msra.mxu0 0.0
    %495 = vmatprep.mubr.f32.mxu0 0.0
    %496 = vmatmul.mubr.f32.gmra.mrb[0].mxu0 %v423
    %v497 = vpop.f32.mrb[0].mxu0
    %v498 = vadd.f32 %v421, %v497
    %v499 = vpop.f32.mrb[0].mxu0
    %500 = vdwg.mxu0
    %v502 = vcombine.high %v498, %v498
    %vm504 = vcmp.ge.f32.partialorder %v498, 0.0
    %vm505 = vcmp.ge.f32.partialorder %v502, 0.0
    %v506 = vmul.f32 %v498, 0.01
    %v507 = vmul.f32 %v502, 0.01
    %v508 = vsel %vm504, %v498, %v506
    %v509 = vsel %vm505, %v502, %v507
    %v510 = vld [vmem:[%s3] sm:$0xf]
    %v511 = vld [vmem:[%s3 + $0x4] sm:$0xf]
    %v512 = vld [vmem:[%s3 + $0x8] sm:$0xf]
    %v513 = vld [vmem:[%s4] sm:$0xf]
    %v514 = vld [vmem:[%s5] sm:$0xf]
    %v515 = vld [vmem:[%s6] sm:$0xf]
    %518 = vrot.lane.b32.xlu0 %v508, 1
    %v519 = vpop.permute.xlu0 %518
    %520 = vrot.lane.b32.xlu0 %v509, 1
    %v521 = vpop.permute.xlu0 %520
    %vm524 = vcmask 7168
    %v525 = vsel %vm524, 0.0, %v519
    %v526 = vsel %vm524, 0.0, %v521
    %vm527 = vcmask 138240
    %v528 = vsel %vm527, %v525, 0.0
    %v529 = vsel %vm527, %v526, 0.0
    %531 = vrot.lane.b32.xlu0 %v528, 127
    %v532 = vpop.permute.xlu0 %531
    %v534 = vsel %vm256, %v511, 0
    %v536 = vsel %vm260, %v532, 0
    %538 = vmatprep.subr.mxu0 0.0
    %539 = vmatpush1.msra.mxu0 %v536
    %540 = vmatprep.subr.mxu0 0.0
    %541 = vmatpush1.msra.mxu0 0.0
    %542 = vmatprep.subr.mxu0 0.0
    %543 = vmatpush1.msra.mxu0 0.0
    %544 = vmatprep.subr.mxu0 0.0
    %545 = vmatpush1.msra.mxu0 0.0
    %546 = vmatprep.subr.mxu0 0.0
    %547 = vmatpush1.msra.mxu0 0.0
    %548 = vmatprep.subr.mxu0 0.0
    %549 = vmatpush1.msra.mxu0 0.0
    %550 = vmatprep.subr.mxu0 0.0
    %551 = vmatpush1.msra.mxu0 0.0
    %552 = vmatprep.subr.mxu0 0.0
    %553 = vmatpush1.msra.mxu0 0.0
    %554 = vmatprep.subr.mxu0 0.0
    %555 = vmatpush1.msra.mxu0 0.0
    %556 = vmatprep.subr.mxu0 0.0
    %557 = vmatpush1.msra.mxu0 0.0
    %558 = vmatprep.subr.mxu0 0.0
    %559 = vmatpush1.msra.mxu0 0.0
    %560 = vmatprep.subr.mxu0 0.0
    %561 = vmatpush1.msra.mxu0 0.0
    %562 = vmatprep.subr.mxu0 0.0
    %563 = vmatpush1.msra.mxu0 0.0
    %564 = vmatprep.subr.mxu0 0.0
    %565 = vmatpush1.msra.mxu0 0.0
    %566 = vmatprep.subr.mxu0 0.0
    %567 = vmatpush1.msra.mxu0 0.0
    %568 = vmatprep.subr.mxu0 0.0
    %569 = vmatpush1.msra.mxu0 0.0
    %570 = vmatprep.subr.mxu0 0.0
    %571 = vmatpush1.msra.mxu0 0.0
    %572 = vmatprep.subr.mxu0 0.0
    %573 = vmatpush1.msra.mxu0 0.0
    %574 = vmatprep.subr.mxu0 0.0
    %575 = vmatpush1.msra.mxu0 0.0
    %576 = vmatprep.subr.mxu0 0.0
    %577 = vmatpush1.msra.mxu0 0.0
    %578 = vmatprep.subr.mxu0 0.0
    %579 = vmatpush1.msra.mxu0 0.0
    %580 = vmatprep.subr.mxu0 0.0
    %581 = vmatpush1.msra.mxu0 0.0
    %582 = vmatprep.subr.mxu0 0.0
    %583 = vmatpush1.msra.mxu0 0.0
    %584 = vmatprep.subr.mxu0 0.0
    %585 = vmatpush1.msra.mxu0 0.0
    %586 = vmatprep.subr.mxu0 0.0
    %587 = vmatpush1.msra.mxu0 0.0
    %588 = vmatprep.subr.mxu0 0.0
    %589 = vmatpush1.msra.mxu0 0.0
    %590 = vmatprep.subr.mxu0 0.0
    %591 = vmatpush1.msra.mxu0 0.0
    %592 = vmatprep.subr.mxu0 0.0
    %593 = vmatpush1.msra.mxu0 0.0
    %594 = vmatprep.subr.mxu0 0.0
    %595 = vmatpush1.msra.mxu0 0.0
    %596 = vmatprep.subr.mxu0 0.0
    %597 = vmatpush1.msra.mxu0 0.0
    %598 = vmatprep.subr.mxu0 0.0
    %599 = vmatpush1.msra.mxu0 0.0
    %600 = vmatprep.subr.mxu0 0.0
    %601 = vmatpush1.msra.mxu0 0.0
    %602 = vmatprep.mubr.f32.mxu0 0.0
    %603 = vmatmul.mubr.f32.gmra.mrb[0].mxu0 %v534
    %v604 = vpop.f32.mrb[0].mxu0
    %v605 = vadd.f32 0.0, %v604
    %v606 = vpop.f32.mrb[0].mxu0
    %607 = vdwg.mxu0
    %609 = vrot.lane.b32.xlu0 %v529, 127
    %v610 = vpop.permute.xlu0 %609
    %v611 = vsel %vm260, %v610, 0
    %613 = vmatprep.subr.mxu0 0.0
    %614 = vmatpush1.msra.mxu0 %v611
    %615 = vmatprep.subr.mxu0 0.0
    %616 = vmatpush1.msra.mxu0 0.0
    %617 = vmatprep.subr.mxu0 0.0
    %618 = vmatpush1.msra.mxu0 0.0
    %619 = vmatprep.subr.mxu0 0.0
    %620 = vmatpush1.msra.mxu0 0.0
    %621 = vmatprep.subr.mxu0 0.0
    %622 = vmatpush1.msra.mxu0 0.0
    %623 = vmatprep.subr.mxu0 0.0
    %624 = vmatpush1.msra.mxu0 0.0
    %625 = vmatprep.subr.mxu0 0.0
    %626 = vmatpush1.msra.mxu0 0.0
    %627 = vmatprep.subr.mxu0 0.0
    %628 = vmatpush1.msra.mxu0 0.0
    %629 = vmatprep.subr.mxu0 0.0
    %630 = vmatpush1.msra.mxu0 0.0
    %631 = vmatprep.subr.mxu0 0.0
    %632 = vmatpush1.msra.mxu0 0.0
    %633 = vmatprep.subr.mxu0 0.0
    %634 = vmatpush1.msra.mxu0 0.0
    %635 = vmatprep.subr.mxu0 0.0
    %636 = vmatpush1.msra.mxu0 0.0
    %637 = vmatprep.subr.mxu0 0.0
    %638 = vmatpush1.msra.mxu0 0.0
    %639 = vmatprep.subr.mxu0 0.0
    %640 = vmatpush1.msra.mxu0 0.0
    %641 = vmatprep.subr.mxu0 0.0
    %642 = vmatpush1.msra.mxu0 0.0
    %643 = vmatprep.subr.mxu0 0.0
    %644 = vmatpush1.msra.mxu0 0.0
    %645 = vmatprep.subr.mxu0 0.0
    %646 = vmatpush1.msra.mxu0 0.0
    %647 = vmatprep.subr.mxu0 0.0
    %648 = vmatpush1.msra.mxu0 0.0
    %649 = vmatprep.subr.mxu0 0.0
    %650 = vmatpush1.msra.mxu0 0.0
    %651 = vmatprep.subr.mxu0 0.0
    %652 = vmatpush1.msra.mxu0 0.0
    %653 = vmatprep.subr.mxu0 0.0
    %654 = vmatpush1.msra.mxu0 0.0
    %655 = vmatprep.subr.mxu0 0.0
    %656 = vmatpush1.msra.mxu0 0.0
    %657 = vmatprep.subr.mxu0 0.0
    %658 = vmatpush1.msra.mxu0 0.0
    %659 = vmatprep.subr.mxu0 0.0
    %660 = vmatpush1.msra.mxu0 0.0
    %661 = vmatprep.subr.mxu0 0.0
    %662 = vmatpush1.msra.mxu0 0.0
    %663 = vmatprep.subr.mxu0 0.0
    %664 = vmatpush1.msra.mxu0 0.0
    %665 = vmatprep.subr.mxu0 0.0
    %666 = vmatpush1.msra.mxu0 0.0
    %667 = vmatprep.subr.mxu0 0.0
    %668 = vmatpush1.msra.mxu0 0.0
    %669 = vmatprep.subr.mxu0 0.0
    %670 = vmatpush1.msra.mxu0 0.0
    %671 = vmatprep.subr.mxu0 0.0
    %672 = vmatpush1.msra.mxu0 0.0
    %673 = vmatprep.subr.mxu0 0.0
    %674 = vmatpush1.msra.mxu0 0.0
    %675 = vmatprep.subr.mxu0 0.0
    %676 = vmatpush1.msra.mxu0 0.0
    %677 = vmatprep.mubr.f32.mxu0 0.0
    %678 = vmatmul.mubr.f32.gmra.mrb[0].mxu0 %v534
    %v679 = vpop.f32.mrb[0].mxu0
    %v680 = vadd.f32 0.0, %v679
    %v681 = vpop.f32.mrb[0].mxu0
    %682 = vdwg.mxu0
    %v684 = vsel %vm256, %v510, 0
    %v686 = vsel %vm260, %v528, 0
    %688 = vmatprep.subr.mxu0 0.0
    %689 = vmatpush1.msra.mxu0 %v686
    %690 = vmatprep.subr.mxu0 0.0
    %691 = vmatpush1.msra.mxu0 0.0
    %692 = vmatprep.subr.mxu0 0.0
    %693 = vmatpush1.msra.mxu0 0.0
    %694 = vmatprep.subr.mxu0 0.0
    %695 = vmatpush1.msra.mxu0 0.0
    %696 = vmatprep.subr.mxu0 0.0
    %697 = vmatpush1.msra.mxu0 0.0
    %698 = vmatprep.subr.mxu0 0.0
    %699 = vmatpush1.msra.mxu0 0.0
    %700 = vmatprep.subr.mxu0 0.0
    %701 = vmatpush1.msra.mxu0 0.0
    %702 = vmatprep.subr.mxu0 0.0
    %703 = vmatpush1.msra.mxu0 0.0
    %704 = vmatprep.subr.mxu0 0.0
    %705 = vmatpush1.msra.mxu0 0.0
    %706 = vmatprep.subr.mxu0 0.0
    %707 = vmatpush1.msra.mxu0 0.0
    %708 = vmatprep.subr.mxu0 0.0
    %709 = vmatpush1.msra.mxu0 0.0
    %710 = vmatprep.subr.mxu0 0.0
    %711 = vmatpush1.msra.mxu0 0.0
    %712 = vmatprep.subr.mxu0 0.0
    %713 = vmatpush1.msra.mxu0 0.0
    %714 = vmatprep.subr.mxu0 0.0
    %715 = vmatpush1.msra.mxu0 0.0
    %716 = vmatprep.subr.mxu0 0.0
    %717 = vmatpush1.msra.mxu0 0.0
    %718 = vmatprep.subr.mxu0 0.0
    %719 = vmatpush1.msra.mxu0 0.0
    %720 = vmatprep.subr.mxu0 0.0
    %721 = vmatpush1.msra.mxu0 0.0
    %722 = vmatprep.subr.mxu0 0.0
    %723 = vmatpush1.msra.mxu0 0.0
    %724 = vmatprep.subr.mxu0 0.0
    %725 = vmatpush1.msra.mxu0 0.0
    %726 = vmatprep.subr.mxu0 0.0
    %727 = vmatpush1.msra.mxu0 0.0
    %728 = vmatprep.subr.mxu0 0.0
    %729 = vmatpush1.msra.mxu0 0.0
    %730 = vmatprep.subr.mxu0 0.0
    %731 = vmatpush1.msra.mxu0 0.0
    %732 = vmatprep.subr.mxu0 0.0
    %733 = vmatpush1.msra.mxu0 0.0
    %734 = vmatprep.subr.mxu0 0.0
    %735 = vmatpush1.msra.mxu0 0.0
    %736 = vmatprep.subr.mxu0 0.0
    %737 = vmatpush1.msra.mxu0 0.0
    %738 = vmatprep.subr.mxu0 0.0
    %739 = vmatpush1.msra.mxu0 0.0
    %740 = vmatprep.subr.mxu0 0.0
    %741 = vmatpush1.msra.mxu0 0.0
    %742 = vmatprep.subr.mxu0 0.0
    %743 = vmatpush1.msra.mxu0 0.0
    %744 = vmatprep.subr.mxu0 0.0
    %745 = vmatpush1.msra.mxu0 0.0
    %746 = vmatprep.subr.mxu0 0.0
    %747 = vmatpush1.msra.mxu0 0.0
    %748 = vmatprep.subr.mxu0 0.0
    %749 = vmatpush1.msra.mxu0 0.0
    %750 = vmatprep.subr.mxu0 0.0
    %751 = vmatpush1.msra.mxu0 0.0
    %752 = vmatprep.mubr.f32.mxu0 0.0
    %753 = vmatmul.mubr.f32.gmra.mrb[0].mxu0 %v684
    %v754 = vpop.f32.mrb[0].mxu0
    %v755 = vadd.f32 %v605, %v754
    %v756 = vpop.f32.mrb[0].mxu0
    %757 = vdwg.mxu0
    %v758 = vsel %vm260, %v529, 0
    %760 = vmatprep.subr.mxu0 0.0
    %761 = vmatpush1.msra.mxu0 %v758
    %762 = vmatprep.subr.mxu0 0.0
    %763 = vmatpush1.msra.mxu0 0.0
    %764 = vmatprep.subr.mxu0 0.0
    %765 = vmatpush1.msra.mxu0 0.0
    %766 = vmatprep.subr.mxu0 0.0
    %767 = vmatpush1.msra.mxu0 0.0
    %768 = vmatprep.subr.mxu0 0.0
    %769 = vmatpush1.msra.mxu0 0.0
    %770 = vmatprep.subr.mxu0 0.0
    %771 = vmatpush1.msra.mxu0 0.0
    %772 = vmatprep.subr.mxu0 0.0
    %773 = vmatpush1.msra.mxu0 0.0
    %774 = vmatprep.subr.mxu0 0.0
    %775 = vmatpush1.msra.mxu0 0.0
    %776 = vmatprep.subr.mxu0 0.0
    %777 = vmatpush1.msra.mxu0 0.0
    %778 = vmatprep.subr.mxu0 0.0
    %779 = vmatpush1.msra.mxu0 0.0
    %780 = vmatprep.subr.mxu0 0.0
    %781 = vmatpush1.msra.mxu0 0.0
    %782 = vmatprep.subr.mxu0 0.0
    %783 = vmatpush1.msra.mxu0 0.0
    %784 = vmatprep.subr.mxu0 0.0
    %785 = vmatpush1.msra.mxu0 0.0
    %786 = vmatprep.subr.mxu0 0.0
    %787 = vmatpush1.msra.mxu0 0.0
    %788 = vmatprep.subr.mxu0 0.0
    %789 = vmatpush1.msra.mxu0 0.0
    %790 = vmatprep.subr.mxu0 0.0
    %791 = vmatpush1.msra.mxu0 0.0
    %792 = vmatprep.subr.mxu0 0.0
    %793 = vmatpush1.msra.mxu0 0.0
    %794 = vmatprep.subr.mxu0 0.0
    %795 = vmatpush1.msra.mxu0 0.0
    %796 = vmatprep.subr.mxu0 0.0
    %797 = vmatpush1.msra.mxu0 0.0
    %798 = vmatprep.subr.mxu0 0.0
    %799 = vmatpush1.msra.mxu0 0.0
    %800 = vmatprep.subr.mxu0 0.0
    %801 = vmatpush1.msra.mxu0 0.0
    %802 = vmatprep.subr.mxu0 0.0
    %803 = vmatpush1.msra.mxu0 0.0
    %804 = vmatprep.subr.mxu0 0.0
    %805 = vmatpush1.msra.mxu0 0.0
    %806 = vmatprep.subr.mxu0 0.0
    %807 = vmatpush1.msra.mxu0 0.0
    %808 = vmatprep.subr.mxu0 0.0
    %809 = vmatpush1.msra.mxu0 0.0
    %810 = vmatprep.subr.mxu0 0.0
    %811 = vmatpush1.msra.mxu0 0.0
    %812 = vmatprep.subr.mxu0 0.0
    %813 = vmatpush1.msra.mxu0 0.0
    %814 = vmatprep.subr.mxu0 0.0
    %815 = vmatpush1.msra.mxu0 0.0
    %816 = vmatprep.subr.mxu0 0.0
    %817 = vmatpush1.msra.mxu0 0.0
    %818 = vmatprep.subr.mxu0 0.0
    %819 = vmatpush1.msra.mxu0 0.0
    %820 = vmatprep.subr.mxu0 0.0
    %821 = vmatpush1.msra.mxu0 0.0
    %822 = vmatprep.subr.mxu0 0.0
    %823 = vmatpush1.msra.mxu0 0.0
    %824 = vmatprep.mubr.f32.mxu0 0.0
    %825 = vmatmul.mubr.f32.gmra.mrb[0].mxu0 %v684
    %v826 = vpop.f32.mrb[0].mxu0
    %v827 = vadd.f32 %v680, %v826
    %v828 = vpop.f32.mrb[0].mxu0
    %829 = vdwg.mxu0
    %830 = vrot.lane.b32.xlu0 %v528, 126
    %v831 = vpop.permute.xlu0 %830
    %v833 = vsel %vm256, %v512, 0
    %v835 = vsel %vm260, %v831, 0
    %837 = vmatprep.subr.mxu0 0.0
    %838 = vmatpush1.msra.mxu0 %v835
    %839 = vmatprep.subr.mxu0 0.0
    %840 = vmatpush1.msra.mxu0 0.0
    %841 = vmatprep.subr.mxu0 0.0
    %842 = vmatpush1.msra.mxu0 0.0
    %843 = vmatprep.subr.mxu0 0.0
    %844 = vmatpush1.msra.mxu0 0.0
    %845 = vmatprep.subr.mxu0 0.0
    %846 = vmatpush1.msra.mxu0 0.0
    %847 = vmatprep.subr.mxu0 0.0
    %848 = vmatpush1.msra.mxu0 0.0
    %849 = vmatprep.subr.mxu0 0.0
    %850 = vmatpush1.msra.mxu0 0.0
    %851 = vmatprep.subr.mxu0 0.0
    %852 = vmatpush1.msra.mxu0 0.0
    %853 = vmatprep.subr.mxu0 0.0
    %854 = vmatpush1.msra.mxu0 0.0
    %855 = vmatprep.subr.mxu0 0.0
    %856 = vmatpush1.msra.mxu0 0.0
    %857 = vmatprep.subr.mxu0 0.0
    %858 = vmatpush1.msra.mxu0 0.0
    %859 = vmatprep.subr.mxu0 0.0
    %860 = vmatpush1.msra.mxu0 0.0
    %861 = vmatprep.subr.mxu0 0.0
    %862 = vmatpush1.msra.mxu0 0.0
    %863 = vmatprep.subr.mxu0 0.0
    %864 = vmatpush1.msra.mxu0 0.0
    %865 = vmatprep.subr.mxu0 0.0
    %866 = vmatpush1.msra.mxu0 0.0
    %867 = vmatprep.subr.mxu0 0.0
    %868 = vmatpush1.msra.mxu0 0.0
    %869 = vmatprep.subr.mxu0 0.0
    %870 = vmatpush1.msra.mxu0 0.0
    %871 = vmatprep.subr.mxu0 0.0
    %872 = vmatpush1.msra.mxu0 0.0
    %873 = vmatprep.subr.mxu0 0.0
    %874 = vmatpush1.msra.mxu0 0.0
    %875 = vmatprep.subr.mxu0 0.0
    %876 = vmatpush1.msra.mxu0 0.0
    %877 = vmatprep.subr.mxu0 0.0
    %878 = vmatpush1.msra.mxu0 0.0
    %879 = vmatprep.subr.mxu0 0.0
    %880 = vmatpush1.msra.mxu0 0.0
    %881 = vmatprep.subr.mxu0 0.0
    %882 = vmatpush1.msra.mxu0 0.0
    %883 = vmatprep.subr.mxu0 0.0
    %884 = vmatpush1.msra.mxu0 0.0
    %885 = vmatprep.subr.mxu0 0.0
    %886 = vmatpush1.msra.mxu0 0.0
    %887 = vmatprep.subr.mxu0 0.0
    %888 = vmatpush1.msra.mxu0 0.0
    %889 = vmatprep.subr.mxu0 0.0
    %890 = vmatpush1.msra.mxu0 0.0
    %891 = vmatprep.subr.mxu0 0.0
    %892 = vmatpush1.msra.mxu0 0.0
    %893 = vmatprep.subr.mxu0 0.0
    %894 = vmatpush1.msra.mxu0 0.0
    %895 = vmatprep.subr.mxu0 0.0
    %896 = vmatpush1.msra.mxu0 0.0
    %897 = vmatprep.subr.mxu0 0.0
    %898 = vmatpush1.msra.mxu0 0.0
    %899 = vmatprep.subr.mxu0 0.0
    %900 = vmatpush1.msra.mxu0 0.0
    %901 = vmatprep.mubr.f32.mxu0 0.0
    %902 = vmatmul.mubr.f32.gmra.mrb[0].mxu0 %v833
    %v903 = vpop.f32.mrb[0].mxu0
    %v904 = vadd.f32 0.0, %v903
    %v905 = vpop.f32.mrb[0].mxu0
    %906 = vdwg.mxu0
    %907 = vrot.lane.b32.xlu0 %v529, 126
    %v908 = vpop.permute.xlu0 %907
    %v909 = vsel %vm260, %v908, 0
    %911 = vmatprep.subr.mxu0 0.0
    %912 = vmatpush1.msra.mxu0 %v909
    %913 = vmatprep.subr.mxu0 0.0
    %914 = vmatpush1.msra.mxu0 0.0
    %915 = vmatprep.subr.mxu0 0.0
    %916 = vmatpush1.msra.mxu0 0.0
    %917 = vmatprep.subr.mxu0 0.0
    %918 = vmatpush1.msra.mxu0 0.0
    %919 = vmatprep.subr.mxu0 0.0
    %920 = vmatpush1.msra.mxu0 0.0
    %921 = vmatprep.subr.mxu0 0.0
    %922 = vmatpush1.msra.mxu0 0.0
    %923 = vmatprep.subr.mxu0 0.0
    %924 = vmatpush1.msra.mxu0 0.0
    %925 = vmatprep.subr.mxu0 0.0
    %926 = vmatpush1.msra.mxu0 0.0
    %927 = vmatprep.subr.mxu0 0.0
    %928 = vmatpush1.msra.mxu0 0.0
    %929 = vmatprep.subr.mxu0 0.0
    %930 = vmatpush1.msra.mxu0 0.0
    %931 = vmatprep.subr.mxu0 0.0
    %932 = vmatpush1.msra.mxu0 0.0
    %933 = vmatprep.subr.mxu0 0.0
    %934 = vmatpush1.msra.mxu0 0.0
    %935 = vmatprep.subr.mxu0 0.0
    %936 = vmatpush1.msra.mxu0 0.0
    %937 = vmatprep.subr.mxu0 0.0
    %938 = vmatpush1.msra.mxu0 0.0
    %939 = vmatprep.subr.mxu0 0.0
    %940 = vmatpush1.msra.mxu0 0.0
    %941 = vmatprep.subr.mxu0 0.0
    %942 = vmatpush1.msra.mxu0 0.0
    %943 = vmatprep.subr.mxu0 0.0
    %944 = vmatpush1.msra.mxu0 0.0
    %945 = vmatprep.subr.mxu0 0.0
    %946 = vmatpush1.msra.mxu0 0.0
    %947 = vmatprep.subr.mxu0 0.0
    %948 = vmatpush1.msra.mxu0 0.0
    %949 = vmatprep.subr.mxu0 0.0
    %950 = vmatpush1.msra.mxu0 0.0
    %951 = vmatprep.subr.mxu0 0.0
    %952 = vmatpush1.msra.mxu0 0.0
    %953 = vmatprep.subr.mxu0 0.0
    %954 = vmatpush1.msra.mxu0 0.0
    %955 = vmatprep.subr.mxu0 0.0
    %956 = vmatpush1.msra.mxu0 0.0
    %957 = vmatprep.subr.mxu0 0.0
    %958 = vmatpush1.msra.mxu0 0.0
    %959 = vmatprep.subr.mxu0 0.0
    %960 = vmatpush1.msra.mxu0 0.0
    %961 = vmatprep.subr.mxu0 0.0
    %962 = vmatpush1.msra.mxu0 0.0
    %963 = vmatprep.subr.mxu0 0.0
    %964 = vmatpush1.msra.mxu0 0.0
    %965 = vmatprep.subr.mxu0 0.0
    %966 = vmatpush1.msra.mxu0 0.0
    %967 = vmatprep.subr.mxu0 0.0
    %968 = vmatpush1.msra.mxu0 0.0
    %969 = vmatprep.subr.mxu0 0.0
    %970 = vmatpush1.msra.mxu0 0.0
    %971 = vmatprep.subr.mxu0 0.0
    %972 = vmatpush1.msra.mxu0 0.0
    %973 = vmatprep.subr.mxu0 0.0
    %974 = vmatpush1.msra.mxu0 0.0
    %975 = vmatprep.mubr.f32.mxu0 0.0
    %976 = vmatmul.mubr.f32.gmra.mrb[0].mxu0 %v833
    %v977 = vpop.f32.mrb[0].mxu0
    %v978 = vadd.f32 0.0, %v977
    %v979 = vpop.f32.mrb[0].mxu0
    %980 = vdwg.mxu0
    %v981 = vadd.f32 %v755, %v904
    %v982 = vadd.f32 %v827, %v978
    %984 = vset.pattern.permute.xlu0 0
    %985 = vperm.xlu0 %984, %v513
    %v986 = vpop.permute.xlu0 %985
    %v988 = vadd.f32 %v981, %v986
    %v989 = vadd.f32 %v982, %v986
    %v990 = vsel %vm83, %v988, 0.0
    %991 = vadd.xlane.f32.xlu0 %v990
    %v992 = vpop.xlane.xlu0 %991
    %v993 = vsel %vm83, %v989, 0.0
    %994 = vadd.xlane.f32.xlu0 %v993
    %v995 = vpop.xlane.xlu0 %994
    %v996 = vmul.f32 %v992, %v90
    %v997 = vmul.f32 %v995, %v90
    %v998 = vsel %vm260, %v996, 0.0
    %v999 = vsel %vm260, %v997, 0.0
    %v1000 = vadd.f32 %v998, %v999
    %v1001 = vrcp.pop 2.0
    %v1002 = vmul.f32 %v1000, %v1001
    %v1003 = vsub.f32 %v988, %v1002
    %v1004 = vsub.f32 %v989, %v1002
    %v1005 = vmul.f32 %v1003, %v1003
    %v1006 = vmul.f32 %v1004, %v1004
    %v1007 = vsel %vm83, %v1005, 0.0
    %1008 = vadd.xlane.f32.xlu0 %v1007
    %v1009 = vpop.xlane.xlu0 %1008
    %v1010 = vsel %vm83, %v1006, 0.0
    %1011 = vadd.xlane.f32.xlu0 %v1010
    %v1012 = vpop.xlane.xlu0 %1011
    %v1013 = vmul.f32 %v1009, %v90
    %v1014 = vmul.f32 %v1012, %v90
    %v1015 = vsel %vm260, %v1013, 0.0
    %v1016 = vsel %vm260, %v1014, 0.0
    %v1017 = vadd.f32 %v1015, %v1016
    %v1018 = vmul.f32 %v1017, %v1001
    %v1019 = vadd.f32 %v1018, 1e-05
    %v1020 = vrsqrt.pop %v1019
    %v1021 = vmul.f32 %v1003, %v1020
    %v1022 = vmul.f32 %v1004, %v1020
    %1024 = vset.pattern.permute.xlu0 0
    %1025 = vperm.xlu0 %1024, %v514
    %v1026 = vpop.permute.xlu0 %1025
    %v1028 = vmul.f32 %v1021, %v1026
    %v1029 = vmul.f32 %v1022, %v1026
    %1031 = vset.pattern.permute.xlu0 0
    %1032 = vperm.xlu0 %1031, %v515
    %v1033 = vpop.permute.xlu0 %1032
    %v1035 = vadd.f32 %v1028, %v1033
    %v1036 = vadd.f32 %v1029, %v1033
    %v1037 = vmax.f32 %v1035, 0.0
    %v1038 = vmax.f32 %v1036, 0.0
    %v1039 = vld [vmem:[%s7] sm:$0xf]
    %v1040 = vld [vmem:[%s7 + $0x4] sm:$0xf]
    %v1041 = vld [vmem:[%s7 + $0x8] sm:$0xf]
    %v1042 = vld [vmem:[%s8] sm:$0xf]
    %v1043 = vld [vmem:[%s9] sm:$0xf]
    %1044 = vrot.lane.b32.xlu0 %v81, 2
    %v1045 = vpop.permute.xlu0 %1044
    %1046 = vrot.lane.b32.xlu0 %v82, 2
    %v1047 = vpop.permute.xlu0 %1046
    %vm1050 = vcmask 15360
    %v1051 = vsel %vm1050, 0.0, %v1045
    %v1052 = vsel %vm1050, 0.0, %v1047
    %1054 = vrot.lane.b32.xlu0 %v1051, 127
    %v1055 = vpop.permute.xlu0 %1054
    %v1057 = vsel %vm256, %v1040, 0
    %v1059 = vsel %vm260, %v1055, 0
    %1061 = vmatprep.subr.mxu0 0.0
    %1062 = vmatpush1.msra.mxu0 %v1059
    %1063 = vmatprep.subr.mxu0 0.0
    %1064 = vmatpush1.msra.mxu0 0.0
    %1065 = vmatprep.subr.mxu0 0.0
    %1066 = vmatpush1.msra.mxu0 0.0
    %1067 = vmatprep.subr.mxu0 0.0
    %1068 = vmatpush1.msra.mxu0 0.0
    %1069 = vmatprep.subr.mxu0 0.0
    %1070 = vmatpush1.msra.mxu0 0.0
    %1071 = vmatprep.subr.mxu0 0.0
    %1072 = vmatpush1.msra.mxu0 0.0
    %1073 = vmatprep.subr.mxu0 0.0
    %1074 = vmatpush1.msra.mxu0 0.0
    %1075 = vmatprep.subr.mxu0 0.0
    %1076 = vmatpush1.msra.mxu0 0.0
    %1077 = vmatprep.subr.mxu0 0.0
    %1078 = vmatpush1.msra.mxu0 0.0
    %1079 = vmatprep.subr.mxu0 0.0
    %1080 = vmatpush1.msra.mxu0 0.0
    %1081 = vmatprep.subr.mxu0 0.0
    %1082 = vmatpush1.msra.mxu0 0.0
    %1083 = vmatprep.subr.mxu0 0.0
    %1084 = vmatpush1.msra.mxu0 0.0
    %1085 = vmatprep.subr.mxu0 0.0
    %1086 = vmatpush1.msra.mxu0 0.0
    %1087 = vmatprep.subr.mxu0 0.0
    %1088 = vmatpush1.msra.mxu0 0.0
    %1089 = vmatprep.subr.mxu0 0.0
    %1090 = vmatpush1.msra.mxu0 0.0
    %1091 = vmatprep.subr.mxu0 0.0
    %1092 = vmatpush1.msra.mxu0 0.0
    %1093 = vmatprep.subr.mxu0 0.0
    %1094 = vmatpush1.msra.mxu0 0.0
    %1095 = vmatprep.subr.mxu0 0.0
    %1096 = vmatpush1.msra.mxu0 0.0
    %1097 = vmatprep.subr.mxu0 0.0
    %1098 = vmatpush1.msra.mxu0 0.0
    %1099 = vmatprep.subr.mxu0 0.0
    %1100 = vmatpush1.msra.mxu0 0.0
    %1101 = vmatprep.subr.mxu0 0.0
    %1102 = vmatpush1.msra.mxu0 0.0
    %1103 = vmatprep.subr.mxu0 0.0
    %1104 = vmatpush1.msra.mxu0 0.0
    %1105 = vmatprep.subr.mxu0 0.0
    %1106 = vmatpush1.msra.mxu0 0.0
    %1107 = vmatprep.subr.mxu0 0.0
    %1108 = vmatpush1.msra.mxu0 0.0
    %1109 = vmatprep.subr.mxu0 0.0
    %1110 = vmatpush1.msra.mxu0 0.0
    %1111 = vmatprep.subr.mxu0 0.0
    %1112 = vmatpush1.msra.mxu0 0.0
    %1113 = vmatprep.subr.mxu0 0.0
    %1114 = vmatpush1.msra.mxu0 0.0
    %1115 = vmatprep.subr.mxu0 0.0
    %1116 = vmatpush1.msra.mxu0 0.0
    %1117 = vmatprep.subr.mxu0 0.0
    %1118 = vmatpush1.msra.mxu0 0.0
    %1119 = vmatprep.subr.mxu0 0.0
    %1120 = vmatpush1.msra.mxu0 0.0
    %1121 = vmatprep.subr.mxu0 0.0
    %1122 = vmatpush1.msra.mxu0 0.0
    %1123 = vmatprep.subr.mxu0 0.0
    %1124 = vmatpush1.msra.mxu0 0.0
    %1125 = vmatprep.mubr.f32.mxu0 0.0
    %1126 = vmatmul.mubr.f32.gmra.mrb[0].mxu0 %v1057
    %v1127 = vpop.f32.mrb[0].mxu0
    %v1128 = vadd.f32 0.0, %v1127
    %v1129 = vpop.f32.mrb[0].mxu0
    %1130 = vdwg.mxu0
    %1132 = vrot.lane.b32.xlu0 %v1052, 127
    %v1133 = vpop.permute.xlu0 %1132
    %v1134 = vsel %vm260, %v1133, 0
    %1136 = vmatprep.subr.mxu0 0.0
    %1137 = vmatpush1.msra.mxu0 %v1134
    %1138 = vmatprep.subr.mxu0 0.0
    %1139 = vmatpush1.msra.mxu0 0.0
    %1140 = vmatprep.subr.mxu0 0.0
    %1141 = vmatpush1.msra.mxu0 0.0
    %1142 = vmatprep.subr.mxu0 0.0
    %1143 = vmatpush1.msra.mxu0 0.0
    %1144 = vmatprep.subr.mxu0 0.0
    %1145 = vmatpush1.msra.mxu0 0.0
    %1146 = vmatprep.subr.mxu0 0.0
    %1147 = vmatpush1.msra.mxu0 0.0
    %1148 = vmatprep.subr.mxu0 0.0
    %1149 = vmatpush1.msra.mxu0 0.0
    %1150 = vmatprep.subr.mxu0 0.0
    %1151 = vmatpush1.msra.mxu0 0.0
    %1152 = vmatprep.subr.mxu0 0.0
    %1153 = vmatpush1.msra.mxu0 0.0
    %1154 = vmatprep.subr.mxu0 0.0
    %1155 = vmatpush1.msra.mxu0 0.0
    %1156 = vmatprep.subr.mxu0 0.0
    %1157 = vmatpush1.msra.mxu0 0.0
    %1158 = vmatprep.subr.mxu0 0.0
    %1159 = vmatpush1.msra.mxu0 0.0
    %1160 = vmatprep.subr.mxu0 0.0
    %1161 = vmatpush1.msra.mxu0 0.0
    %1162 = vmatprep.subr.mxu0 0.0
    %1163 = vmatpush1.msra.mxu0 0.0
    %1164 = vmatprep.subr.mxu0 0.0
    %1165 = vmatpush1.msra.mxu0 0.0
    %1166 = vmatprep.subr.mxu0 0.0
    %1167 = vmatpush1.msra.mxu0 0.0
    %1168 = vmatprep.subr.mxu0 0.0
    %1169 = vmatpush1.msra.mxu0 0.0
    %1170 = vmatprep.subr.mxu0 0.0
    %1171 = vmatpush1.msra.mxu0 0.0
    %1172 = vmatprep.subr.mxu0 0.0
    %1173 = vmatpush1.msra.mxu0 0.0
    %1174 = vmatprep.subr.mxu0 0.0
    %1175 = vmatpush1.msra.mxu0 0.0
    %1176 = vmatprep.subr.mxu0 0.0
    %1177 = vmatpush1.msra.mxu0 0.0
    %1178 = vmatprep.subr.mxu0 0.0
    %1179 = vmatpush1.msra.mxu0 0.0
    %1180 = vmatprep.subr.mxu0 0.0
    %1181 = vmatpush1.msra.mxu0 0.0
    %1182 = vmatprep.subr.mxu0 0.0
    %1183 = vmatpush1.msra.mxu0 0.0
    %1184 = vmatprep.subr.mxu0 0.0
    %1185 = vmatpush1.msra.mxu0 0.0
    %1186 = vmatprep.subr.mxu0 0.0
    %1187 = vmatpush1.msra.mxu0 0.0
    %1188 = vmatprep.subr.mxu0 0.0
    %1189 = vmatpush1.msra.mxu0 0.0
    %1190 = vmatprep.subr.mxu0 0.0
    %1191 = vmatpush1.msra.mxu0 0.0
    %1192 = vmatprep.subr.mxu0 0.0
    %1193 = vmatpush1.msra.mxu0 0.0
    %1194 = vmatprep.subr.mxu0 0.0
    %1195 = vmatpush1.msra.mxu0 0.0
    %1196 = vmatprep.subr.mxu0 0.0
    %1197 = vmatpush1.msra.mxu0 0.0
    %1198 = vmatprep.subr.mxu0 0.0
    %1199 = vmatpush1.msra.mxu0 0.0
    %1200 = vmatprep.mubr.f32.mxu0 0.0
    %1201 = vmatmul.mubr.f32.gmra.mrb[0].mxu0 %v1057
    %v1202 = vpop.f32.mrb[0].mxu0
    %v1203 = vadd.f32 0.0, %v1202
    %v1204 = vpop.f32.mrb[0].mxu0
    %1205 = vdwg.mxu0
    %v1207 = vsel %vm256, %v1039, 0
    %v1209 = vsel %vm260, %v1051, 0
    %1211 = vmatprep.subr.mxu0 0.0
    %1212 = vmatpush1.msra.mxu0 %v1209
    %1213 = vmatprep.subr.mxu0 0.0
    %1214 = vmatpush1.msra.mxu0 0.0
    %1215 = vmatprep.subr.mxu0 0.0
    %1216 = vmatpush1.msra.mxu0 0.0
    %1217 = vmatprep.subr.mxu0 0.0
    %1218 = vmatpush1.msra.mxu0 0.0
    %1219 = vmatprep.subr.mxu0 0.0
    %1220 = vmatpush1.msra.mxu0 0.0
    %1221 = vmatprep.subr.mxu0 0.0
    %1222 = vmatpush1.msra.mxu0 0.0
    %1223 = vmatprep.subr.mxu0 0.0
    %1224 = vmatpush1.msra.mxu0 0.0
    %1225 = vmatprep.subr.mxu0 0.0
    %1226 = vmatpush1.msra.mxu0 0.0
    %1227 = vmatprep.subr.mxu0 0.0
    %1228 = vmatpush1.msra.mxu0 0.0
    %1229 = vmatprep.subr.mxu0 0.0
    %1230 = vmatpush1.msra.mxu0 0.0
    %1231 = vmatprep.subr.mxu0 0.0
    %1232 = vmatpush1.msra.mxu0 0.0
    %1233 = vmatprep.subr.mxu0 0.0
    %1234 = vmatpush1.msra.mxu0 0.0
    %1235 = vmatprep.subr.mxu0 0.0
    %1236 = vmatpush1.msra.mxu0 0.0
    %1237 = vmatprep.subr.mxu0 0.0
    %1238 = vmatpush1.msra.mxu0 0.0
    %1239 = vmatprep.subr.mxu0 0.0
    %1240 = vmatpush1.msra.mxu0 0.0
    %1241 = vmatprep.subr.mxu0 0.0
    %1242 = vmatpush1.msra.mxu0 0.0
    %1243 = vmatprep.subr.mxu0 0.0
    %1244 = vmatpush1.msra.mxu0 0.0
    %1245 = vmatprep.subr.mxu0 0.0
    %1246 = vmatpush1.msra.mxu0 0.0
    %1247 = vmatprep.subr.mxu0 0.0
    %1248 = vmatpush1.msra.mxu0 0.0
    %1249 = vmatprep.subr.mxu0 0.0
    %1250 = vmatpush1.msra.mxu0 0.0
    %1251 = vmatprep.subr.mxu0 0.0
    %1252 = vmatpush1.msra.mxu0 0.0
    %1253 = vmatprep.subr.mxu0 0.0
    %1254 = vmatpush1.msra.mxu0 0.0
    %1255 = vmatprep.subr.mxu0 0.0
    %1256 = vmatpush1.msra.mxu0 0.0
    %1257 = vmatprep.subr.mxu0 0.0
    %1258 = vmatpush1.msra.mxu0 0.0
    %1259 = vmatprep.subr.mxu0 0.0
    %1260 = vmatpush1.msra.mxu0 0.0
    %1261 = vmatprep.subr.mxu0 0.0
    %1262 = vmatpush1.msra.mxu0 0.0
    %1263 = vmatprep.subr.mxu0 0.0
    %1264 = vmatpush1.msra.mxu0 0.0
    %1265 = vmatprep.subr.mxu0 0.0
    %1266 = vmatpush1.msra.mxu0 0.0
    %1267 = vmatprep.subr.mxu0 0.0
    %1268 = vmatpush1.msra.mxu0 0.0
    %1269 = vmatprep.subr.mxu0 0.0
    %1270 = vmatpush1.msra.mxu0 0.0
    %1271 = vmatprep.subr.mxu0 0.0
    %1272 = vmatpush1.msra.mxu0 0.0
    %1273 = vmatprep.subr.mxu0 0.0
    %1274 = vmatpush1.msra.mxu0 0.0
    %1275 = vmatprep.mubr.f32.mxu0 0.0
    %1276 = vmatmul.mubr.f32.gmra.mrb[0].mxu0 %v1207
    %v1277 = vpop.f32.mrb[0].mxu0
    %v1278 = vadd.f32 %v1128, %v1277
    %v1279 = vpop.f32.mrb[0].mxu0
    %1280 = vdwg.mxu0
    %v1281 = vsel %vm260, %v1052, 0
    %1283 = vmatprep.subr.mxu0 0.0
    %1284 = vmatpush1.msra.mxu0 %v1281
    %1285 = vmatprep.subr.mxu0 0.0
    %1286 = vmatpush1.msra.mxu0 0.0
    %1287 = vmatprep.subr.mxu0 0.0
    %1288 = vmatpush1.msra.mxu0 0.0
    %1289 = vmatprep.subr.mxu0 0.0
    %1290 = vmatpush1.msra.mxu0 0.0
    %1291 = vmatprep.subr.mxu0 0.0
    %1292 = vmatpush1.msra.mxu0 0.0
    %1293 = vmatprep.subr.mxu0 0.0
    %1294 = vmatpush1.msra.mxu0 0.0
    %1295 = vmatprep.subr.mxu0 0.0
    %1296 = vmatpush1.msra.mxu0 0.0
    %1297 = vmatprep.subr.mxu0 0.0
    %1298 = vmatpush1.msra.mxu0 0.0
    %1299 = vmatprep.subr.mxu0 0.0
    %1300 = vmatpush1.msra.mxu0 0.0
    %1301 = vmatprep.subr.mxu0 0.0
    %1302 = vmatpush1.msra.mxu0 0.0
    %1303 = vmatprep.subr.mxu0 0.0
    %1304 = vmatpush1.msra.mxu0 0.0
    %1305 = vmatprep.subr.mxu0 0.0
    %1306 = vmatpush1.msra.mxu0 0.0
    %1307 = vmatprep.subr.mxu0 0.0
    %1308 = vmatpush1.msra.mxu0 0.0
    %1309 = vmatprep.subr.mxu0 0.0
    %1310 = vmatpush1.msra.mxu0 0.0
    %1311 = vmatprep.subr.mxu0 0.0
    %1312 = vmatpush1.msra.mxu0 0.0
    %1313 = vmatprep.subr.mxu0 0.0
    %1314 = vmatpush1.msra.mxu0 0.0
    %1315 = vmatprep.subr.mxu0 0.0
    %1316 = vmatpush1.msra.mxu0 0.0
    %1317 = vmatprep.subr.mxu0 0.0
    %1318 = vmatpush1.msra.mxu0 0.0
    %1319 = vmatprep.subr.mxu0 0.0
    %1320 = vmatpush1.msra.mxu0 0.0
    %1321 = vmatprep.subr.mxu0 0.0
    %1322 = vmatpush1.msra.mxu0 0.0
    %1323 = vmatprep.subr.mxu0 0.0
    %1324 = vmatpush1.msra.mxu0 0.0
    %1325 = vmatprep.subr.mxu0 0.0
    %1326 = vmatpush1.msra.mxu0 0.0
    %1327 = vmatprep.subr.mxu0 0.0
    %1328 = vmatpush1.msra.mxu0 0.0
    %1329 = vmatprep.subr.mxu0 0.0
    %1330 = vmatpush1.msra.mxu0 0.0
    %1331 = vmatprep.subr.mxu0 0.0
    %1332 = vmatpush1.msra.mxu0 0.0
    %1333 = vmatprep.subr.mxu0 0.0
    %1334 = vmatpush1.msra.mxu0 0.0
    %1335 = vmatprep.subr.mxu0 0.0
    %1336 = vmatpush1.msra.mxu0 0.0
    %1337 = vmatprep.subr.mxu0 0.0
    %1338 = vmatpush1.msra.mxu0 0.0
    %1339 = vmatprep.subr.mxu0 0.0
    %1340 = vmatpush1.msra.mxu0 0.0
    %1341 = vmatprep.subr.mxu0 0.0
    %1342 = vmatpush1.msra.mxu0 0.0
    %1343 = vmatprep.subr.mxu0 0.0
    %1344 = vmatpush1.msra.mxu0 0.0
    %1345 = vmatprep.subr.mxu0 0.0
    %1346 = vmatpush1.msra.mxu0 0.0
    %1347 = vmatprep.mubr.f32.mxu0 0.0
    %1348 = vmatmul.mubr.f32.gmra.mrb[0].mxu0 %v1207
    %v1349 = vpop.f32.mrb[0].mxu0
    %v1350 = vadd.f32 %v1203, %v1349
    %v1351 = vpop.f32.mrb[0].mxu0
    %1352 = vdwg.mxu0
    %1353 = vrot.lane.b32.xlu0 %v1051, 126
    %v1354 = vpop.permute.xlu0 %1353
    %v1356 = vsel %vm256, %v1041, 0
    %v1358 = vsel %vm260, %v1354, 0
    %1360 = vmatprep.subr.mxu0 0.0
    %1361 = vmatpush1.msra.mxu0 %v1358
    %1362 = vmatprep.subr.mxu0 0.0
    %1363 = vmatpush1.msra.mxu0 0.0
    %1364 = vmatprep.subr.mxu0 0.0
    %1365 = vmatpush1.msra.mxu0 0.0
    %1366 = vmatprep.subr.mxu0 0.0
    %1367 = vmatpush1.msra.mxu0 0.0
    %1368 = vmatprep.subr.mxu0 0.0
    %1369 = vmatpush1.msra.mxu0 0.0
    %1370 = vmatprep.subr.mxu0 0.0
    %1371 = vmatpush1.msra.mxu0 0.0
    %1372 = vmatprep.subr.mxu0 0.0
    %1373 = vmatpush1.msra.mxu0 0.0
    %1374 = vmatprep.subr.mxu0 0.0
    %1375 = vmatpush1.msra.mxu0 0.0
    %1376 = vmatprep.subr.mxu0 0.0
    %1377 = vmatpush1.msra.mxu0 0.0
    %1378 = vmatprep.subr.mxu0 0.0
    %1379 = vmatpush1.msra.mxu0 0.0
    %1380 = vmatprep.subr.mxu0 0.0
    %1381 = vmatpush1.msra.mxu0 0.0
    %1382 = vmatprep.subr.mxu0 0.0
    %1383 = vmatpush1.msra.mxu0 0.0
    %1384 = vmatprep.subr.mxu0 0.0
    %1385 = vmatpush1.msra.mxu0 0.0
    %1386 = vmatprep.subr.mxu0 0.0
    %1387 = vmatpush1.msra.mxu0 0.0
    %1388 = vmatprep.subr.mxu0 0.0
    %1389 = vmatpush1.msra.mxu0 0.0
    %1390 = vmatprep.subr.mxu0 0.0
    %1391 = vmatpush1.msra.mxu0 0.0
    %1392 = vmatprep.subr.mxu0 0.0
    %1393 = vmatpush1.msra.mxu0 0.0
    %1394 = vmatprep.subr.mxu0 0.0
    %1395 = vmatpush1.msra.mxu0 0.0
    %1396 = vmatprep.subr.mxu0 0.0
    %1397 = vmatpush1.msra.mxu0 0.0
    %1398 = vmatprep.subr.mxu0 0.0
    %1399 = vmatpush1.msra.mxu0 0.0
    %1400 = vmatprep.subr.mxu0 0.0
    %1401 = vmatpush1.msra.mxu0 0.0
    %1402 = vmatprep.subr.mxu0 0.0
    %1403 = vmatpush1.msra.mxu0 0.0
    %1404 = vmatprep.subr.mxu0 0.0
    %1405 = vmatpush1.msra.mxu0 0.0
    %1406 = vmatprep.subr.mxu0 0.0
    %1407 = vmatpush1.msra.mxu0 0.0
    %1408 = vmatprep.subr.mxu0 0.0
    %1409 = vmatpush1.msra.mxu0 0.0
    %1410 = vmatprep.subr.mxu0 0.0
    %1411 = vmatpush1.msra.mxu0 0.0
    %1412 = vmatprep.subr.mxu0 0.0
    %1413 = vmatpush1.msra.mxu0 0.0
    %1414 = vmatprep.subr.mxu0 0.0
    %1415 = vmatpush1.msra.mxu0 0.0
    %1416 = vmatprep.subr.mxu0 0.0
    %1417 = vmatpush1.msra.mxu0 0.0
    %1418 = vmatprep.subr.mxu0 0.0
    %1419 = vmatpush1.msra.mxu0 0.0
    %1420 = vmatprep.subr.mxu0 0.0
    %1421 = vmatpush1.msra.mxu0 0.0
    %1422 = vmatprep.subr.mxu0 0.0
    %1423 = vmatpush1.msra.mxu0 0.0
    %1424 = vmatprep.mubr.f32.mxu0 0.0
    %1425 = vmatmul.mubr.f32.gmra.mrb[0].mxu0 %v1356
    %v1426 = vpop.f32.mrb[0].mxu0
    %v1427 = vadd.f32 0.0, %v1426
    %v1428 = vpop.f32.mrb[0].mxu0
    %1429 = vdwg.mxu0
    %1430 = vrot.lane.b32.xlu0 %v1052, 126
    %v1431 = vpop.permute.xlu0 %1430
    %v1432 = vsel %vm260, %v1431, 0
    %1434 = vmatprep.subr.mxu0 0.0
    %1435 = vmatpush1.msra.mxu0 %v1432
    %1436 = vmatprep.subr.mxu0 0.0
    %1437 = vmatpush1.msra.mxu0 0.0
    %1438 = vmatprep.subr.mxu0 0.0
    %1439 = vmatpush1.msra.mxu0 0.0
    %1440 = vmatprep.subr.mxu0 0.0
    %1441 = vmatpush1.msra.mxu0 0.0
    %1442 = vmatprep.subr.mxu0 0.0
    %1443 = vmatpush1.msra.mxu0 0.0
    %1444 = vmatprep.subr.mxu0 0.0
    %1445 = vmatpush1.msra.mxu0 0.0
    %1446 = vmatprep.subr.mxu0 0.0
    %1447 = vmatpush1.msra.mxu0 0.0
    %1448 = vmatprep.subr.mxu0 0.0
    %1449 = vmatpush1.msra.mxu0 0.0
    %1450 = vmatprep.subr.mxu0 0.0
    %1451 = vmatpush1.msra.mxu0 0.0
    %1452 = vmatprep.subr.mxu0 0.0
    %1453 = vmatpush1.msra.mxu0 0.0
    %1454 = vmatprep.subr.mxu0 0.0
    %1455 = vmatpush1.msra.mxu0 0.0
    %1456 = vmatprep.subr.mxu0 0.0
    %1457 = vmatpush1.msra.mxu0 0.0
    %1458 = vmatprep.subr.mxu0 0.0
    %1459 = vmatpush1.msra.mxu0 0.0
    %1460 = vmatprep.subr.mxu0 0.0
    %1461 = vmatpush1.msra.mxu0 0.0
    %1462 = vmatprep.subr.mxu0 0.0
    %1463 = vmatpush1.msra.mxu0 0.0
    %1464 = vmatprep.subr.mxu0 0.0
    %1465 = vmatpush1.msra.mxu0 0.0
    %1466 = vmatprep.subr.mxu0 0.0
    %1467 = vmatpush1.msra.mxu0 0.0
    %1468 = vmatprep.subr.mxu0 0.0
    %1469 = vmatpush1.msra.mxu0 0.0
    %1470 = vmatprep.subr.mxu0 0.0
    %1471 = vmatpush1.msra.mxu0 0.0
    %1472 = vmatprep.subr.mxu0 0.0
    %1473 = vmatpush1.msra.mxu0 0.0
    %1474 = vmatprep.subr.mxu0 0.0
    %1475 = vmatpush1.msra.mxu0 0.0
    %1476 = vmatprep.subr.mxu0 0.0
    %1477 = vmatpush1.msra.mxu0 0.0
    %1478 = vmatprep.subr.mxu0 0.0
    %1479 = vmatpush1.msra.mxu0 0.0
    %1480 = vmatprep.subr.mxu0 0.0
    %1481 = vmatpush1.msra.mxu0 0.0
    %1482 = vmatprep.subr.mxu0 0.0
    %1483 = vmatpush1.msra.mxu0 0.0
    %1484 = vmatprep.subr.mxu0 0.0
    %1485 = vmatpush1.msra.mxu0 0.0
    %1486 = vmatprep.subr.mxu0 0.0
    %1487 = vmatpush1.msra.mxu0 0.0
    %1488 = vmatprep.subr.mxu0 0.0
    %1489 = vmatpush1.msra.mxu0 0.0
    %1490 = vmatprep.subr.mxu0 0.0
    %1491 = vmatpush1.msra.mxu0 0.0
    %1492 = vmatprep.subr.mxu0 0.0
    %1493 = vmatpush1.msra.mxu0 0.0
    %1494 = vmatprep.subr.mxu0 0.0
    %1495 = vmatpush1.msra.mxu0 0.0
    %1496 = vmatprep.subr.mxu0 0.0
    %1497 = vmatpush1.msra.mxu0 0.0
    %1498 = vmatprep.mubr.f32.mxu0 0.0
    %1499 = vmatmul.mubr.f32.gmra.mrb[0].mxu0 %v1356
    %v1500 = vpop.f32.mrb[0].mxu0
    %v1501 = vadd.f32 0.0, %v1500
    %v1502 = vpop.f32.mrb[0].mxu0
    %1503 = vdwg.mxu0
    %v1504 = vadd.f32 %v1278, %v1427
    %v1505 = vadd.f32 %v1350, %v1501
    %v1506 = vsel %vm83, %v1504, 0.0
    %1507 = vadd.xlane.f32.xlu0 %v1506
    %v1508 = vpop.xlane.xlu0 %1507
    %v1509 = vsel %vm83, %v1505, 0.0
    %1510 = vadd.xlane.f32.xlu0 %v1509
    %v1511 = vpop.xlane.xlu0 %1510
    %v1512 = vmul.f32 %v1508, %v90
    %v1513 = vmul.f32 %v1511, %v90
    %v1514 = vsel %vm260, %v1512, 0.0
    %v1515 = vsel %vm260, %v1513, 0.0
    %v1516 = vadd.f32 %v1514, %v1515
    %v1517 = vmul.f32 %v1516, %v1001
    %v1518 = vsub.f32 %v1504, %v1517
    %v1519 = vsub.f32 %v1505, %v1517
    %v1520 = vmul.f32 %v1518, %v1518
    %v1521 = vmul.f32 %v1519, %v1519
    %v1522 = vsel %vm83, %v1520, 0.0
    %1523 = vadd.xlane.f32.xlu0 %v1522
    %v1524 = vpop.xlane.xlu0 %1523
    %v1525 = vsel %vm83, %v1521, 0.0
    %1526 = vadd.xlane.f32.xlu0 %v1525
    %v1527 = vpop.xlane.xlu0 %1526
    %v1528 = vmul.f32 %v1524, %v90
    %v1529 = vmul.f32 %v1527, %v90
    %v1530 = vsel %vm260, %v1528, 0.0
    %v1531 = vsel %vm260, %v1529, 0.0
    %v1532 = vadd.f32 %v1530, %v1531
    %v1533 = vmul.f32 %v1532, %v1001
    %v1534 = vadd.f32 %v1533, 1e-05
    %v1535 = vrsqrt.pop %v1534
    %v1536 = vmul.f32 %v1518, %v1535
    %v1537 = vmul.f32 %v1519, %v1535
    %1539 = vset.pattern.permute.xlu0 0
    %1540 = vperm.xlu0 %1539, %v1042
    %v1541 = vpop.permute.xlu0 %1540
    %v1543 = vmul.f32 %v1536, %v1541
    %v1544 = vmul.f32 %v1537, %v1541
    %1546 = vset.pattern.permute.xlu0 0
    %1547 = vperm.xlu0 %1546, %v1043
    %v1548 = vpop.permute.xlu0 %1547
    %v1550 = vadd.f32 %v1543, %v1548
    %v1551 = vadd.f32 %v1544, %v1548
    %v1552 = vmax.f32 %v1550, 0.0
    %v1553 = vmax.f32 %v1551, 0.0
    %v1554 = vadd.f32 %v1552, %v81
    %v1555 = vadd.f32 %v1553, %v82
    %v1556 = vmax.f32 %v1554, 0.0
    %v1557 = vmax.f32 %v1555, 0.0
    %v1558 = vld [vmem:[%s10] sm:$0xf]
    %v1559 = vld [vmem:[%s10 + $0x4] sm:$0xf]
    %v1560 = vld [vmem:[%s10 + $0x8] sm:$0xf]
    %v1561 = vld [vmem:[%s11] sm:$0xf]
    %v1562 = vld [vmem:[%s12] sm:$0xf]
    %1565 = vrot.lane.b32.xlu0 %v1556, 4
    %v1566 = vpop.permute.xlu0 %1565
    %1567 = vrot.lane.b32.xlu0 %v1557, 4
    %v1568 = vpop.permute.xlu0 %1567
    %v1571 = vsel %vm256, 0.0, %v1566
    %v1572 = vsel %vm256, 0.0, %v1568
    %1574 = vrot.lane.b32.xlu0 %v1571, 126
    %v1575 = vpop.permute.xlu0 %1574
    %v1577 = vsel %vm256, %v1559, 0
    %v1579 = vsel %vm260, %v1575, 0
    %1581 = vmatprep.subr.mxu0 0.0
    %1582 = vmatpush1.msra.mxu0 %v1579
    %1583 = vmatprep.subr.mxu0 0.0
    %1584 = vmatpush1.msra.mxu0 0.0
    %1585 = vmatprep.subr.mxu0 0.0
    %1586 = vmatpush1.msra.mxu0 0.0
    %1587 = vmatprep.subr.mxu0 0.0
    %1588 = vmatpush1.msra.mxu0 0.0
    %1589 = vmatprep.subr.mxu0 0.0
    %1590 = vmatpush1.msra.mxu0 0.0
    %1591 = vmatprep.subr.mxu0 0.0
    %1592 = vmatpush1.msra.mxu0 0.0
    %1593 = vmatprep.subr.mxu0 0.0
    %1594 = vmatpush1.msra.mxu0 0.0
    %1595 = vmatprep.subr.mxu0 0.0
    %1596 = vmatpush1.msra.mxu0 0.0
    %1597 = vmatprep.subr.mxu0 0.0
    %1598 = vmatpush1.msra.mxu0 0.0
    %1599 = vmatprep.subr.mxu0 0.0
    %1600 = vmatpush1.msra.mxu0 0.0
    %1601 = vmatprep.subr.mxu0 0.0
    %1602 = vmatpush1.msra.mxu0 0.0
    %1603 = vmatprep.subr.mxu0 0.0
    %1604 = vmatpush1.msra.mxu0 0.0
    %1605 = vmatprep.subr.mxu0 0.0
    %1606 = vmatpush1.msra.mxu0 0.0
    %1607 = vmatprep.subr.mxu0 0.0
    %1608 = vmatpush1.msra.mxu0 0.0
    %1609 = vmatprep.subr.mxu0 0.0
    %1610 = vmatpush1.msra.mxu0 0.0
    %1611 = vmatprep.subr.mxu0 0.0
    %1612 = vmatpush1.msra.mxu0 0.0
    %1613 = vmatprep.subr.mxu0 0.0
    %1614 = vmatpush1.msra.mxu0 0.0
    %1615 = vmatprep.subr.mxu0 0.0
    %1616 = vmatpush1.msra.mxu0 0.0
    %1617 = vmatprep.subr.mxu0 0.0
    %1618 = vmatpush1.msra.mxu0 0.0
    %1619 = vmatprep.subr.mxu0 0.0
    %1620 = vmatpush1.msra.mxu0 0.0
    %1621 = vmatprep.subr.mxu0 0.0
    %1622 = vmatpush1.msra.mxu0 0.0
    %1623 = vmatprep.subr.mxu0 0.0
    %1624 = vmatpush1.msra.mxu0 0.0
    %1625 = vmatprep.subr.mxu0 0.0
    %1626 = vmatpush1.msra.mxu0 0.0
    %1627 = vmatprep.subr.mxu0 0.0
    %1628 = vmatpush1.msra.mxu0 0.0
    %1629 = vmatprep.subr.mxu0 0.0
    %1630 = vmatpush1.msra.mxu0 0.0
    %1631 = vmatprep.subr.mxu0 0.0
    %1632 = vmatpush1.msra.mxu0 0.0
    %1633 = vmatprep.subr.mxu0 0.0
    %1634 = vmatpush1.msra.mxu0 0.0
    %1635 = vmatprep.subr.mxu0 0.0
    %1636 = vmatpush1.msra.mxu0 0.0
    %1637 = vmatprep.subr.mxu0 0.0
    %1638 = vmatpush1.msra.mxu0 0.0
    %1639 = vmatprep.subr.mxu0 0.0
    %1640 = vmatpush1.msra.mxu0 0.0
    %1641 = vmatprep.subr.mxu0 0.0
    %1642 = vmatpush1.msra.mxu0 0.0
    %1643 = vmatprep.subr.mxu0 0.0
    %1644 = vmatpush1.msra.mxu0 0.0
    %1645 = vmatprep.mubr.f32.mxu0 0.0
    %1646 = vmatmul.mubr.f32.gmra.mrb[0].mxu0 %v1577
    %v1647 = vpop.f32.mrb[0].mxu0
    %v1648 = vadd.f32 0.0, %v1647
    %v1649 = vpop.f32.mrb[0].mxu0
    %1650 = vdwg.mxu0
    %1652 = vrot.lane.b32.xlu0 %v1572, 126
    %v1653 = vpop.permute.xlu0 %1652
    %v1654 = vsel %vm260, %v1653, 0
    %1656 = vmatprep.subr.mxu0 0.0
    %1657 = vmatpush1.msra.mxu0 %v1654
    %1658 = vmatprep.subr.mxu0 0.0
    %1659 = vmatpush1.msra.mxu0 0.0
    %1660 = vmatprep.subr.mxu0 0.0
    %1661 = vmatpush1.msra.mxu0 0.0
    %1662 = vmatprep.subr.mxu0 0.0
    %1663 = vmatpush1.msra.mxu0 0.0
    %1664 = vmatprep.subr.mxu0 0.0
    %1665 = vmatpush1.msra.mxu0 0.0
    %1666 = vmatprep.subr.mxu0 0.0
    %1667 = vmatpush1.msra.mxu0 0.0
    %1668 = vmatprep.subr.mxu0 0.0
    %1669 = vmatpush1.msra.mxu0 0.0
    %1670 = vmatprep.subr.mxu0 0.0
    %1671 = vmatpush1.msra.mxu0 0.0
    %1672 = vmatprep.subr.mxu0 0.0
    %1673 = vmatpush1.msra.mxu0 0.0
    %1674 = vmatprep.subr.mxu0 0.0
    %1675 = vmatpush1.msra.mxu0 0.0
    %1676 = vmatprep.subr.mxu0 0.0
    %1677 = vmatpush1.msra.mxu0 0.0
    %1678 = vmatprep.subr.mxu0 0.0
    %1679 = vmatpush1.msra.mxu0 0.0
    %1680 = vmatprep.subr.mxu0 0.0
    %1681 = vmatpush1.msra.mxu0 0.0
    %1682 = vmatprep.subr.mxu0 0.0
    %1683 = vmatpush1.msra.mxu0 0.0
    %1684 = vmatprep.subr.mxu0 0.0
    %1685 = vmatpush1.msra.mxu0 0.0
    %1686 = vmatprep.subr.mxu0 0.0
    %1687 = vmatpush1.msra.mxu0 0.0
    %1688 = vmatprep.subr.mxu0 0.0
    %1689 = vmatpush1.msra.mxu0 0.0
    %1690 = vmatprep.subr.mxu0 0.0
    %1691 = vmatpush1.msra.mxu0 0.0
    %1692 = vmatprep.subr.mxu0 0.0
    %1693 = vmatpush1.msra.mxu0 0.0
    %1694 = vmatprep.subr.mxu0 0.0
    %1695 = vmatpush1.msra.mxu0 0.0
    %1696 = vmatprep.subr.mxu0 0.0
    %1697 = vmatpush1.msra.mxu0 0.0
    %1698 = vmatprep.subr.mxu0 0.0
    %1699 = vmatpush1.msra.mxu0 0.0
    %1700 = vmatprep.subr.mxu0 0.0
    %1701 = vmatpush1.msra.mxu0 0.0
    %1702 = vmatprep.subr.mxu0 0.0
    %1703 = vmatpush1.msra.mxu0 0.0
    %1704 = vmatprep.subr.mxu0 0.0
    %1705 = vmatpush1.msra.mxu0 0.0
    %1706 = vmatprep.subr.mxu0 0.0
    %1707 = vmatpush1.msra.mxu0 0.0
    %1708 = vmatprep.subr.mxu0 0.0
    %1709 = vmatpush1.msra.mxu0 0.0
    %1710 = vmatprep.subr.mxu0 0.0
    %1711 = vmatpush1.msra.mxu0 0.0
    %1712 = vmatprep.subr.mxu0 0.0
    %1713 = vmatpush1.msra.mxu0 0.0
    %1714 = vmatprep.subr.mxu0 0.0
    %1715 = vmatpush1.msra.mxu0 0.0
    %1716 = vmatprep.subr.mxu0 0.0
    %1717 = vmatpush1.msra.mxu0 0.0
    %1718 = vmatprep.subr.mxu0 0.0
    %1719 = vmatpush1.msra.mxu0 0.0
    %1720 = vmatprep.mubr.f32.mxu0 0.0
    %1721 = vmatmul.mubr.f32.gmra.mrb[0].mxu0 %v1577
    %v1722 = vpop.f32.mrb[0].mxu0
    %v1723 = vadd.f32 0.0, %v1722
    %v1724 = vpop.f32.mrb[0].mxu0
    %1725 = vdwg.mxu0
    %v1727 = vsel %vm256, %v1558, 0
    %v1729 = vsel %vm260, %v1571, 0
    %1731 = vmatprep.subr.mxu0 0.0
    %1732 = vmatpush1.msra.mxu0 %v1729
    %1733 = vmatprep.subr.mxu0 0.0
    %1734 = vmatpush1.msra.mxu0 0.0
    %1735 = vmatprep.subr.mxu0 0.0
    %1736 = vmatpush1.msra.mxu0 0.0
    %1737 = vmatprep.subr.mxu0 0.0
    %1738 = vmatpush1.msra.mxu0 0.0
    %1739 = vmatprep.subr.mxu0 0.0
    %1740 = vmatpush1.msra.mxu0 0.0
    %1741 = vmatprep.subr.mxu0 0.0
    %1742 = vmatpush1.msra.mxu0 0.0
    %1743 = vmatprep.subr.mxu0 0.0
    %1744 = vmatpush1.msra.mxu0 0.0
    %1745 = vmatprep.subr.mxu0 0.0
    %1746 = vmatpush1.msra.mxu0 0.0
    %1747 = vmatprep.subr.mxu0 0.0
    %1748 = vmatpush1.msra.mxu0 0.0
    %1749 = vmatprep.subr.mxu0 0.0
    %1750 = vmatpush1.msra.mxu0 0.0
    %1751 = vmatprep.subr.mxu0 0.0
    %1752 = vmatpush1.msra.mxu0 0.0
    %1753 = vmatprep.subr.mxu0 0.0
    %1754 = vmatpush1.msra.mxu0 0.0
    %1755 = vmatprep.subr.mxu0 0.0
    %1756 = vmatpush1.msra.mxu0 0.0
    %1757 = vmatprep.subr.mxu0 0.0
    %1758 = vmatpush1.msra.mxu0 0.0
    %1759 = vmatprep.subr.mxu0 0.0
    %1760 = vmatpush1.msra.mxu0 0.0
    %1761 = vmatprep.subr.mxu0 0.0
    %1762 = vmatpush1.msra.mxu0 0.0
    %1763 = vmatprep.subr.mxu0 0.0
    %1764 = vmatpush1.msra.mxu0 0.0
    %1765 = vmatprep.subr.mxu0 0.0
    %1766 = vmatpush1.msra.mxu0 0.0
    %1767 = vmatprep.subr.mxu0 0.0
    %1768 = vmatpush1.msra.mxu0 0.0
    %1769 = vmatprep.subr.mxu0 0.0
    %1770 = vmatpush1.msra.mxu0 0.0
    %1771 = vmatprep.subr.mxu0 0.0
    %1772 = vmatpush1.msra.mxu0 0.0
    %1773 = vmatprep.subr.mxu0 0.0
    %1774 = vmatpush1.msra.mxu0 0.0
    %1775 = vmatprep.subr.mxu0 0.0
    %1776 = vmatpush1.msra.mxu0 0.0
    %1777 = vmatprep.subr.mxu0 0.0
    %1778 = vmatpush1.msra.mxu0 0.0
    %1779 = vmatprep.subr.mxu0 0.0
    %1780 = vmatpush1.msra.mxu0 0.0
    %1781 = vmatprep.subr.mxu0 0.0
    %1782 = vmatpush1.msra.mxu0 0.0
    %1783 = vmatprep.subr.mxu0 0.0
    %1784 = vmatpush1.msra.mxu0 0.0
    %1785 = vmatprep.subr.mxu0 0.0
    %1786 = vmatpush1.msra.mxu0 0.0
    %1787 = vmatprep.subr.mxu0 0.0
    %1788 = vmatpush1.msra.mxu0 0.0
    %1789 = vmatprep.subr.mxu0 0.0
    %1790 = vmatpush1.msra.mxu0 0.0
    %1791 = vmatprep.subr.mxu0 0.0
    %1792 = vmatpush1.msra.mxu0 0.0
    %1793 = vmatprep.subr.mxu0 0.0
    %1794 = vmatpush1.msra.mxu0 0.0
    %1795 = vmatprep.mubr.f32.mxu0 0.0
    %1796 = vmatmul.mubr.f32.gmra.mrb[0].mxu0 %v1727
    %v1797 = vpop.f32.mrb[0].mxu0
    %v1798 = vadd.f32 %v1648, %v1797
    %v1799 = vpop.f32.mrb[0].mxu0
    %1800 = vdwg.mxu0
    %v1801 = vsel %vm260, %v1572, 0
    %1803 = vmatprep.subr.mxu0 0.0
    %1804 = vmatpush1.msra.mxu0 %v1801
    %1805 = vmatprep.subr.mxu0 0.0
    %1806 = vmatpush1.msra.mxu0 0.0
    %1807 = vmatprep.subr.mxu0 0.0
    %1808 = vmatpush1.msra.mxu0 0.0
    %1809 = vmatprep.subr.mxu0 0.0
    %1810 = vmatpush1.msra.mxu0 0.0
    %1811 = vmatprep.subr.mxu0 0.0
    %1812 = vmatpush1.msra.mxu0 0.0
    %1813 = vmatprep.subr.mxu0 0.0
    %1814 = vmatpush1.msra.mxu0 0.0
    %1815 = vmatprep.subr.mxu0 0.0
    %1816 = vmatpush1.msra.mxu0 0.0
    %1817 = vmatprep.subr.mxu0 0.0
    %1818 = vmatpush1.msra.mxu0 0.0
    %1819 = vmatprep.subr.mxu0 0.0
    %1820 = vmatpush1.msra.mxu0 0.0
    %1821 = vmatprep.subr.mxu0 0.0
    %1822 = vmatpush1.msra.mxu0 0.0
    %1823 = vmatprep.subr.mxu0 0.0
    %1824 = vmatpush1.msra.mxu0 0.0
    %1825 = vmatprep.subr.mxu0 0.0
    %1826 = vmatpush1.msra.mxu0 0.0
    %1827 = vmatprep.subr.mxu0 0.0
    %1828 = vmatpush1.msra.mxu0 0.0
    %1829 = vmatprep.subr.mxu0 0.0
    %1830 = vmatpush1.msra.mxu0 0.0
    %1831 = vmatprep.subr.mxu0 0.0
    %1832 = vmatpush1.msra.mxu0 0.0
    %1833 = vmatprep.subr.mxu0 0.0
    %1834 = vmatpush1.msra.mxu0 0.0
    %1835 = vmatprep.subr.mxu0 0.0
    %1836 = vmatpush1.msra.mxu0 0.0
    %1837 = vmatprep.subr.mxu0 0.0
    %1838 = vmatpush1.msra.mxu0 0.0
    %1839 = vmatprep.subr.mxu0 0.0
    %1840 = vmatpush1.msra.mxu0 0.0
    %1841 = vmatprep.subr.mxu0 0.0
    %1842 = vmatpush1.msra.mxu0 0.0
    %1843 = vmatprep.subr.mxu0 0.0
    %1844 = vmatpush1.msra.mxu0 0.0
    %1845 = vmatprep.subr.mxu0 0.0
    %1846 = vmatpush1.msra.mxu0 0.0
    %1847 = vmatprep.subr.mxu0 0.0
    %1848 = vmatpush1.msra.mxu0 0.0
    %1849 = vmatprep.subr.mxu0 0.0
    %1850 = vmatpush1.msra.mxu0 0.0
    %1851 = vmatprep.subr.mxu0 0.0
    %1852 = vmatpush1.msra.mxu0 0.0
    %1853 = vmatprep.subr.mxu0 0.0
    %1854 = vmatpush1.msra.mxu0 0.0
    %1855 = vmatprep.subr.mxu0 0.0
    %1856 = vmatpush1.msra.mxu0 0.0
    %1857 = vmatprep.subr.mxu0 0.0
    %1858 = vmatpush1.msra.mxu0 0.0
    %1859 = vmatprep.subr.mxu0 0.0
    %1860 = vmatpush1.msra.mxu0 0.0
    %1861 = vmatprep.subr.mxu0 0.0
    %1862 = vmatpush1.msra.mxu0 0.0
    %1863 = vmatprep.subr.mxu0 0.0
    %1864 = vmatpush1.msra.mxu0 0.0
    %1865 = vmatprep.subr.mxu0 0.0
    %1866 = vmatpush1.msra.mxu0 0.0
    %1867 = vmatprep.mubr.f32.mxu0 0.0
    %1868 = vmatmul.mubr.f32.gmra.mrb[0].mxu0 %v1727
    %v1869 = vpop.f32.mrb[0].mxu0
    %v1870 = vadd.f32 %v1723, %v1869
    %v1871 = vpop.f32.mrb[0].mxu0
    %1872 = vdwg.mxu0
    %1873 = vrot.lane.b32.xlu0 %v1571, 124
    %v1874 = vpop.permute.xlu0 %1873
    %v1876 = vsel %vm256, %v1560, 0
    %v1878 = vsel %vm260, %v1874, 0
    %1880 = vmatprep.subr.mxu0 0.0
    %1881 = vmatpush1.msra.mxu0 %v1878
    %1882 = vmatprep.subr.mxu0 0.0
    %1883 = vmatpush1.msra.mxu0 0.0
    %1884 = vmatprep.subr.mxu0 0.0
    %1885 = vmatpush1.msra.mxu0 0.0
    %1886 = vmatprep.subr.mxu0 0.0
    %1887 = vmatpush1.msra.mxu0 0.0
    %1888 = vmatprep.subr.mxu0 0.0
    %1889 = vmatpush1.msra.mxu0 0.0
    %1890 = vmatprep.subr.mxu0 0.0
    %1891 = vmatpush1.msra.mxu0 0.0
    %1892 = vmatprep.subr.mxu0 0.0
    %1893 = vmatpush1.msra.mxu0 0.0
    %1894 = vmatprep.subr.mxu0 0.0
    %1895 = vmatpush1.msra.mxu0 0.0
    %1896 = vmatprep.subr.mxu0 0.0
    %1897 = vmatpush1.msra.mxu0 0.0
    %1898 = vmatprep.subr.mxu0 0.0
    %1899 = vmatpush1.msra.mxu0 0.0
    %1900 = vmatprep.subr.mxu0 0.0
    %1901 = vmatpush1.msra.mxu0 0.0
    %1902 = vmatprep.subr.mxu0 0.0
    %1903 = vmatpush1.msra.mxu0 0.0
    %1904 = vmatprep.subr.mxu0 0.0
    %1905 = vmatpush1.msra.mxu0 0.0
    %1906 = vmatprep.subr.mxu0 0.0
    %1907 = vmatpush1.msra.mxu0 0.0
    %1908 = vmatprep.subr.mxu0 0.0
    %1909 = vmatpush1.msra.mxu0 0.0
    %1910 = vmatprep.subr.mxu0 0.0
    %1911 = vmatpush1.msra.mxu0 0.0
    %1912 = vmatprep.subr.mxu0 0.0
    %1913 = vmatpush1.msra.mxu0 0.0
    %1914 = vmatprep.subr.mxu0 0.0
    %1915 = vmatpush1.msra.mxu0 0.0
    %1916 = vmatprep.subr.mxu0 0.0
    %1917 = vmatpush1.msra.mxu0 0.0
    %1918 = vmatprep.subr.mxu0 0.0
    %1919 = vmatpush1.msra.mxu0 0.0
    %1920 = vmatprep.subr.mxu0 0.0
    %1921 = vmatpush1.msra.mxu0 0.0
    %1922 = vmatprep.subr.mxu0 0.0
    %1923 = vmatpush1.msra.mxu0 0.0
    %1924 = vmatprep.subr.mxu0 0.0
    %1925 = vmatpush1.msra.mxu0 0.0
    %1926 = vmatprep.subr.mxu0 0.0
    %1927 = vmatpush1.msra.mxu0 0.0
    %1928 = vmatprep.subr.mxu0 0.0
    %1929 = vmatpush1.msra.mxu0 0.0
    %1930 = vmatprep.subr.mxu0 0.0
    %1931 = vmatpush1.msra.mxu0 0.0
    %1932 = vmatprep.subr.mxu0 0.0
    %1933 = vmatpush1.msra.mxu0 0.0
    %1934 = vmatprep.subr.mxu0 0.0
    %1935 = vmatpush1.msra.mxu0 0.0
    %1936 = vmatprep.subr.mxu0 0.0
    %1937 = vmatpush1.msra.mxu0 0.0
    %1938 = vmatprep.subr.mxu0 0.0
    %1939 = vmatpush1.msra.mxu0 0.0
    %1940 = vmatprep.subr.mxu0 0.0
    %1941 = vmatpush1.msra.mxu0 0.0
    %1942 = vmatprep.subr.mxu0 0.0
    %1943 = vmatpush1.msra.mxu0 0.0
    %1944 = vmatprep.mubr.f32.mxu0 0.0
    %1945 = vmatmul.mubr.f32.gmra.mrb[0].mxu0 %v1876
    %v1946 = vpop.f32.mrb[0].mxu0
    %v1947 = vadd.f32 0.0, %v1946
    %v1948 = vpop.f32.mrb[0].mxu0
    %1949 = vdwg.mxu0
    %1950 = vrot.lane.b32.xlu0 %v1572, 124
    %v1951 = vpop.permute.xlu0 %1950
    %v1952 = vsel %vm260, %v1951, 0
    %1954 = vmatprep.subr.mxu0 0.0
    %1955 = vmatpush1.msra.mxu0 %v1952
    %1956 = vmatprep.subr.mxu0 0.0
    %1957 = vmatpush1.msra.mxu0 0.0
    %1958 = vmatprep.subr.mxu0 0.0
    %1959 = vmatpush1.msra.mxu0 0.0
    %1960 = vmatprep.subr.mxu0 0.0
    %1961 = vmatpush1.msra.mxu0 0.0
    %1962 = vmatprep.subr.mxu0 0.0
    %1963 = vmatpush1.msra.mxu0 0.0
    %1964 = vmatprep.subr.mxu0 0.0
    %1965 = vmatpush1.msra.mxu0 0.0
    %1966 = vmatprep.subr.mxu0 0.0
    %1967 = vmatpush1.msra.mxu0 0.0
    %1968 = vmatprep.subr.mxu0 0.0
    %1969 = vmatpush1.msra.mxu0 0.0
    %1970 = vmatprep.subr.mxu0 0.0
    %1971 = vmatpush1.msra.mxu0 0.0
    %1972 = vmatprep.subr.mxu0 0.0
    %1973 = vmatpush1.msra.mxu0 0.0
    %1974 = vmatprep.subr.mxu0 0.0
    %1975 = vmatpush1.msra.mxu0 0.0
    %1976 = vmatprep.subr.mxu0 0.0
    %1977 = vmatpush1.msra.mxu0 0.0
    %1978 = vmatprep.subr.mxu0 0.0
    %1979 = vmatpush1.msra.mxu0 0.0
    %1980 = vmatprep.subr.mxu0 0.0
    %1981 = vmatpush1.msra.mxu0 0.0
    %1982 = vmatprep.subr.mxu0 0.0
    %1983 = vmatpush1.msra.mxu0 0.0
    %1984 = vmatprep.subr.mxu0 0.0
    %1985 = vmatpush1.msra.mxu0 0.0
    %1986 = vmatprep.subr.mxu0 0.0
    %1987 = vmatpush1.msra.mxu0 0.0
    %1988 = vmatprep.subr.mxu0 0.0
    %1989 = vmatpush1.msra.mxu0 0.0
    %1990 = vmatprep.subr.mxu0 0.0
    %1991 = vmatpush1.msra.mxu0 0.0
    %1992 = vmatprep.subr.mxu0 0.0
    %1993 = vmatpush1.msra.mxu0 0.0
    %1994 = vmatprep.subr.mxu0 0.0
    %1995 = vmatpush1.msra.mxu0 0.0
    %1996 = vmatprep.subr.mxu0 0.0
    %1997 = vmatpush1.msra.mxu0 0.0
    %1998 = vmatprep.subr.mxu0 0.0
    %1999 = vmatpush1.msra.mxu0 0.0
    %2000 = vmatprep.subr.mxu0 0.0
    %2001 = vmatpush1.msra.mxu0 0.0
    %2002 = vmatprep.subr.mxu0 0.0
    %2003 = vmatpush1.msra.mxu0 0.0
    %2004 = vmatprep.subr.mxu0 0.0
    %2005 = vmatpush1.msra.mxu0 0.0
    %2006 = vmatprep.subr.mxu0 0.0
    %2007 = vmatpush1.msra.mxu0 0.0
    %2008 = vmatprep.subr.mxu0 0.0
    %2009 = vmatpush1.msra.mxu0 0.0
    %2010 = vmatprep.subr.mxu0 0.0
    %2011 = vmatpush1.msra.mxu0 0.0
    %2012 = vmatprep.subr.mxu0 0.0
    %2013 = vmatpush1.msra.mxu0 0.0
    %2014 = vmatprep.subr.mxu0 0.0
    %2015 = vmatpush1.msra.mxu0 0.0
    %2016 = vmatprep.subr.mxu0 0.0
    %2017 = vmatpush1.msra.mxu0 0.0
    %2018 = vmatprep.mubr.f32.mxu0 0.0
    %2019 = vmatmul.mubr.f32.gmra.mrb[0].mxu0 %v1876
    %v2020 = vpop.f32.mrb[0].mxu0
    %v2021 = vadd.f32 0.0, %v2020
    %v2022 = vpop.f32.mrb[0].mxu0
    %2023 = vdwg.mxu0
    %v2024 = vadd.f32 %v1798, %v1947
    %v2025 = vadd.f32 %v1870, %v2021
    %v2026 = vsel %vm83, %v2024, 0.0
    %2027 = vadd.xlane.f32.xlu0 %v2026
    %v2028 = vpop.xlane.xlu0 %2027
    %v2029 = vsel %vm83, %v2025, 0.0
    %2030 = vadd.xlane.f32.xlu0 %v2029
    %v2031 = vpop.xlane.xlu0 %2030
    %v2032 = vmul.f32 %v2028, %v90
    %v2033 = vmul.f32 %v2031, %v90
    %v2034 = vsel %vm260, %v2032, 0.0
    %v2035 = vsel %vm260, %v2033, 0.0
    %v2036 = vadd.f32 %v2034, %v2035
    %v2037 = vmul.f32 %v2036, %v1001
    %v2038 = vsub.f32 %v2024, %v2037
    %v2039 = vsub.f32 %v2025, %v2037
    %v2040 = vmul.f32 %v2038, %v2038
    %v2041 = vmul.f32 %v2039, %v2039
    %v2042 = vsel %vm83, %v2040, 0.0
    %2043 = vadd.xlane.f32.xlu0 %v2042
    %v2044 = vpop.xlane.xlu0 %2043
    %v2045 = vsel %vm83, %v2041, 0.0
    %2046 = vadd.xlane.f32.xlu0 %v2045
    %v2047 = vpop.xlane.xlu0 %2046
    %v2048 = vmul.f32 %v2044, %v90
    %v2049 = vmul.f32 %v2047, %v90
    %v2050 = vsel %vm260, %v2048, 0.0
    %v2051 = vsel %vm260, %v2049, 0.0
    %v2052 = vadd.f32 %v2050, %v2051
    %v2053 = vmul.f32 %v2052, %v1001
    %v2054 = vadd.f32 %v2053, 1e-05
    %v2055 = vrsqrt.pop %v2054
    %v2056 = vmul.f32 %v2038, %v2055
    %v2057 = vmul.f32 %v2039, %v2055
    %2059 = vset.pattern.permute.xlu0 0
    %2060 = vperm.xlu0 %2059, %v1561
    %v2061 = vpop.permute.xlu0 %2060
    %v2063 = vmul.f32 %v2056, %v2061
    %v2064 = vmul.f32 %v2057, %v2061
    %2066 = vset.pattern.permute.xlu0 0
    %2067 = vperm.xlu0 %2066, %v1562
    %v2068 = vpop.permute.xlu0 %2067
    %v2070 = vadd.f32 %v2063, %v2068
    %v2071 = vadd.f32 %v2064, %v2068
    %v2072 = vmax.f32 %v2070, 0.0
    %v2073 = vmax.f32 %v2071, 0.0
    %v2074 = vadd.f32 %v2072, %v1556
    %v2075 = vadd.f32 %v2073, %v1557
    %v2076 = vmax.f32 %v2074, 0.0
    %v2077 = vmax.f32 %v2075, 0.0
    %s2078 = sld [smem:[#allocation6]]
    %s2079 = sld [smem:[#allocation6 + $0x1]]
    %s2080 = sld [smem:[#allocation6 + $0x2]]
    %s2081 = sld [smem:[#allocation6 + $0x3]]
    %v2082 = vstv %s2078
    %v2083 = vmul.f32 %v2082, %v2076
    %v2084 = vmul.f32 %v2082, %v2077
    %v2085 = vstv %s2079
    %v2086 = vmul.f32 %v2085, %v1037
    %v2087 = vmul.f32 %v2085, %v1038
    %v2088 = vadd.f32 %v2083, %v2086
    %v2089 = vadd.f32 %v2084, %v2087
    %v2090 = vtanh.pop %v2088
    %v2091 = vtanh.pop %v2089
    %v2092 = vstv %s2080
    %v2093 = vmul.f32 %v2092, %v2076
    %v2094 = vmul.f32 %v2092, %v2077
    %v2095 = vstv %s2081
    %v2096 = vmul.f32 %v2095, %v1037
    %v2097 = vmul.f32 %v2095, %v1038
    %v2098 = vadd.f32 %v2093, %v2096
    %v2099 = vadd.f32 %v2094, %v2097
    %v2100 = vxor.u32 %v2098, 2147483648
    %v2101 = vxor.u32 %v2099, 2147483648
    %v2102 = vmul.f32 %v2100, 1.442695
    %v2103 = vpow.pop %v2102
    %v2104 = vmul.f32 %v2101, 1.442695
    %v2105 = vpow.pop %v2104
    %v2106 = vadd.f32 %v2103, 1.0
    %v2107 = vadd.f32 %v2105, 1.0
    %v2108 = vrcp.pop %v2106
    %v2109 = vmul.f32 1.0, %v2108
    %v2110 = vrcp.pop %v2107
    %v2111 = vmul.f32 1.0, %v2110
    %v2112 = vmul.f32 %v2090, %v2109
    %v2113 = vmul.f32 %v2091, %v2111
    %v2114 = vadd.f32 %v2112, %v81
    %v2115 = vadd.f32 %v2113, %v82
    %v2116 = vld [vmem:[%s14] sm:$0xf]
    %v2117 = vmul.f32 %v2114, %v2116
    %v2118 = vmul.f32 %v2115, %v2116
    %v2119 = vsel %vm83, %v2117, 0.0
    %2120 = vadd.xlane.f32.xlu0 %v2119
    %v2121 = vpop.xlane.xlu0 %2120
    %v2122 = vsel %vm83, %v2118, 0.0
    %2123 = vadd.xlane.f32.xlu0 %v2122
    %v2124 = vpop.xlane.xlu0 %2123
    %v2125 = vsel %vm260, %v2121, 0.0
    %v2126 = vrot.slane %v2125, 4
    %v2127 = vadd.f32 %v2125, %v2126
    %v2128 = vrot.slane %v2127, 2
    %v2129 = vadd.f32 %v2127, %v2128
    %v2130 = vrot.slane %v2129, 1
    %v2131 = vadd.f32 %v2129, %v2130
    %v2132 = vsel %vm260, %v2124, 0.0
    %v2133 = vrot.slane %v2132, 4
    %v2134 = vadd.f32 %v2132, %v2133
    %v2135 = vrot.slane %v2134, 2
    %v2136 = vadd.f32 %v2134, %v2135
    %v2137 = vrot.slane %v2136, 1
    %v2138 = vadd.f32 %v2136, %v2137
    %s2139 = sld [smem:[#allocation2]]
    %v2140 = vstv %s2139
    %v2141 = vadd.f32 %v2131, %v2140
    %v2142 = vadd.f32 %v2138, %v2140
    %vm2145 = vcmask 1041409
    %v2146 = vsel %vm2145, %v2142, %v2141
    %vm2148 = vcmask 1024
    %2149 = vst.msk [vmem:[%s16] sm:$0x3] %vm2148, %v2146
    // Predicated region
    $region74: #{tpu_custom_call.1} parent=1 // pred_check
      _
    $region75: #{tpu_custom_call.1} parent=1 // pred_check_branch
      %2151 = sbr.rel (0) target = $region77
    $region76: #{tpu_custom_call.1} parent=1 // pred_region
      _
    $region77: #{tpu_custom_call.1} parent=1 // pred_fallthru
      _
    // Predicated region
    $region78: #{tpu_custom_call.1} parent=1 // pred_check
      _
    $region79: #{tpu_custom_call.1} parent=1 // pred_check_branch
      %2153 = sbr.rel (0) target = $region81
    $region80: #{tpu_custom_call.1} parent=1 // pred_region
      _
    $region81: #{tpu_custom_call.1} parent=1 // pred_fallthru
      _
    %2154 = vsyncpa [#allocation4], 1
    %2155 = vsyncpa [#allocation5], 1

</llo_original>
